<compile_context>
chip_gen: v7x
topology: tpu7x:2x2x1
jax: 0.10.0
libtpu: 0.0.40
codegen_flags: <defaults>
</compile_context>

<pallas_src>
import functools

import jax
import jax.numpy as jnp
from jax.experimental import pallas as pl
from jax.experimental.pallas import tpu as pltpu


def _residual_conv_bn_relu_kernel(x_ref, w_ref, bias_ref, gamma_ref, beta_ref,
                                  col_ref, o_ref, *, n, h, w, cin, cout, eps):
    """Fused ReLU(BN(Conv3x3(x)+b)) + x on an (N*C, H*W) channel-major slab."""
    hw = h * w

    x = x_ref[...]                                    # (n*cin, hw)  f32
    col = col_ref[...]                                # (1, hw)      int32, j index
    lane = jax.lax.broadcasted_iota(jnp.int32, (1, hw), 1)   # flat spatial index
    bias = bias_ref[...]                              # (cout, 1)
    gamma = gamma_ref[...]                            # (cout, 1)
    beta = beta_ref[...]                              # (cout, 1)

    # ---- Conv3x3 (pad=1) as 9 accumulated (cout, cin) @ (cin, hw) matmuls.
    # Each tap is the input rolled along the flattened H*W lane axis; image
    # borders (and roll wrap-around, which only occurs on those borders) are
    # zeroed with iota masks — the in-kernel substitute for zero padding.
    ys = [jnp.zeros((cout, hw), jnp.float32) for _ in range(n)]
    for kh in range(3):
        for kw in range(3):
            dy, dx = kh - 1, kw - 1
            shift = (-(dy * w + dx)) % hw             # tap[p] = x[p + dy*w + dx]
            tap = x if shift == 0 else pltpu.roll(x, shift, axis=1)

            valid = None
            if dy == -1:
                valid = lane >= w                     # needs row i-1 >= 0
            elif dy == 1:
                valid = lane < (h - 1) * w            # needs row i+1 <= h-1
            if dx == -1:
                c_ok = col >= 1                       # needs col j-1 >= 0
                valid = c_ok if valid is None else (valid & c_ok)
            elif dx == 1:
                c_ok = col <= w - 2                   # needs col j+1 <= w-1
                valid = c_ok if valid is None else (valid & c_ok)
            if valid is not None:
                tap = jnp.where(valid, tap, 0.0)

            w_tap = w_ref[kh * 3 + kw]                # (cout, cin)
            for b in range(n):
                ys[b] = ys[b] + jnp.dot(
                    w_tap, tap[b * cin:(b + 1) * cin, :],
                    preferred_element_type=jnp.float32)

    ys = [y + bias for y in ys]                       # conv bias

    # ---- BatchNorm2d train-mode batch statistics, two-pass (mean, then
    # centred variance) to avoid the E[y^2] - E[y]^2 cancellation issue.
    count = jnp.float32(n * hw)
    mean = sum(jnp.sum(y, axis=1, keepdims=True) for y in ys) / count      # (cout,1)
    var = sum(jnp.sum(jnp.square(y - mean), axis=1, keepdims=True)
              for y in ys) / count                                         # (cout,1)
    inv = jax.lax.rsqrt(var + jnp.float32(eps))
    scale = gamma * inv
    shift_c = beta - mean * scale

    # ---- affine + ReLU + residual add, written back channel-major (NCHW).
    for b in range(n):
        res = x[b * cin:(b + 1) * cin, :]             # residual = original x
        out_b = jnp.maximum(ys[b] * scale + shift_c, 0.0) + res
        o_ref[pl.ds(b * cout, cout), :] = out_b.astype(o_ref.dtype)


def prepare_residual_params(weight_oihw, bias, gamma, beta):
    """One-time parameter prep (hoisted out of the per-step forward)."""
    cout, cin, kh, kw = weight_oihw.shape
    assert (kh, kw) == (3, 3), "conv_block uses a 3x3 kernel"
    # (Cout, Cin, 3, 3) -> (9, Cout, Cin); tap index t = kh*3 + kw.
    w_taps = jnp.transpose(weight_oihw.astype(jnp.float32), (2, 3, 0, 1))
    w_taps = w_taps.reshape(9, cout, cin)
    to_col = lambda v: v.astype(jnp.float32).reshape(cout, 1)
    return w_taps, to_col(bias), to_col(gamma), to_col(beta)


@functools.partial(jax.jit, static_argnames=("eps",))
def residual_forward(x_nchw, w_taps, bias_c, gamma_c, beta_c, eps=1e-5):
    """Residual(conv_block): ReLU(BN(Conv3x3(x)+b)) + x (PyTorch train-mode BN)."""
    n, cin, h, w = x_nchw.shape
    _, cout, _ = w_taps.shape
    assert cin == cout, "Residual needs ch_in == ch_out"
    hw = h * w

    # Free reshapes only (contiguous trailing dims): no transpose / pad / copy.
    x2d = x_nchw.astype(jnp.float32).reshape(n * cin, hw)
    # Column index of every flattened spatial position; constant-folded at
    # compile time (h, w static), so it costs nothing per step.
    col = jnp.tile(jnp.arange(w, dtype=jnp.int32), h).reshape(1, hw)

    kernel = functools.partial(_residual_conv_bn_relu_kernel,
                               n=n, h=h, w=w, cin=cin, cout=cout, eps=eps)

    io_bytes = (x2d.size + w_taps.size + 3 * cout + hw + n * cout * hw) * 4
    cost = pl.CostEstimate(
        flops=2 * 9 * n * cout * cin * hw + 12 * n * cout * hw,
        transcendentals=cout,                          # one rsqrt per channel
        bytes_accessed=io_bytes)

    out2d = pl.pallas_call(
        kernel,
        out_shape=jax.ShapeDtypeStruct((n * cout, hw), jnp.float32),
        grid_spec=pltpu.PrefetchScalarGridSpec(
            num_scalar_prefetch=0,
            # Whole problem (~35 KB of VMEM incl. double-buffering) is one grid
            # step: a grid would only add ~0.35 us/step pipeline overhead.
            # Constants are now <3 KB, so default double-buffering is free and
            # no pl.Buffered(1) override is needed.
            # TODO(synk): at real sizes, split the grid over N ("parallel") for
            # the v7x 2-TC path and combine per-core BN partial sums.
            grid=(1,),
            in_specs=[
                pl.BlockSpec((n * cin, hw), lambda i: (0, 0)),
                pl.BlockSpec((9, cout, cin), lambda i: (0, 0, 0)),
                pl.BlockSpec((cout, 1), lambda i: (0, 0)),
                pl.BlockSpec((cout, 1), lambda i: (0, 0)),
                pl.BlockSpec((cout, 1), lambda i: (0, 0)),
                pl.BlockSpec((1, hw), lambda i: (0, 0)),
            ],
            out_specs=pl.BlockSpec((n * cout, hw), lambda i: (0, 0)),
        ),
        compiler_params=pltpu.CompilerParams(
            dimension_semantics=("arbitrary",)),
        cost_estimate=cost,
    )(x2d, w_taps, bias_c, gamma_c, beta_c, col)

    # (N*Cout, H*W) is already NCHW-contiguous — free reshape back.
    return out2d.reshape(n, cout, h, w)


def _reference(x_nchw, weight_oihw, bias, gamma, beta, eps=1e-5):
    """Pure-JAX reference for Residual(conv_block) in training mode."""
    y = jax.lax.conv_general_dilated(
        x_nchw, weight_oihw, window_strides=(1, 1), padding=((1, 1), (1, 1)),
        dimension_numbers=("NCHW", "OIHW", "NCHW"),
        precision=jax.lax.Precision.HIGHEST)
    y = y + bias[None, :, None, None]
    mean = jnp.mean(y, axis=(0, 2, 3), keepdims=True)
    var = jnp.mean(jnp.square(y - mean), axis=(0, 2, 3), keepdims=True)
    yn = (y - mean) * jax.lax.rsqrt(var + eps) * gamma[None, :, None, None] \
        + beta[None, :, None, None]
    return jnp.maximum(yn, 0.0) + x_nchw


if __name__ == "__main__":
    # Residual requires ch_in == ch_out; H*W = 256 gives lane-dense slabs.
    N, C, H, W = 2, 8, 16, 16

    key = jax.random.PRNGKey(0)
    k_x, k_w, k_b, k_g, k_bt = jax.random.split(key, 5)
    x = jax.random.normal(k_x, (N, C, H, W), dtype=jnp.float32)
    weight = 0.1 * jax.random.normal(k_w, (C, C, 3, 3), dtype=jnp.float32)
    bias = 0.1 * jax.random.normal(k_b, (C,), dtype=jnp.float32)
    gamma = 1.0 + 0.1 * jax.random.normal(k_g, (C,), dtype=jnp.float32)
    beta = 0.1 * jax.random.normal(k_bt, (C,), dtype=jnp.float32)

    params = prepare_residual_params(weight, bias, gamma, beta)   # one-time prep

    out = residual_forward(x, *params)
    jax.block_until_ready(out)
    assert out.shape == (N, C, H, W), out.shape

    ref = _reference(x, weight, bias, gamma, beta)
    max_err = float(jnp.max(jnp.abs(out - ref)))
    assert jnp.allclose(out, ref, atol=2e-3, rtol=2e-3), max_err

    print("KERNEL_OK")
</pallas_src>

<mosaic_0001>
module attributes {stable_mosaic.version = 11 : i64} {
  func.func @_residual_conv_bn_relu_kernel(%arg0: i32, %arg1: memref<16x256xf32, #tpu.memory_space<vmem>>, %arg2: memref<9x8x8xf32, #tpu.memory_space<vmem>>, %arg3: memref<8x1xf32, #tpu.memory_space<vmem>>, %arg4: memref<8x1xf32, #tpu.memory_space<vmem>>, %arg5: memref<8x1xf32, #tpu.memory_space<vmem>>, %arg6: memref<1x256xi32, #tpu.memory_space<vmem>>, %arg7: memref<16x256xf32, #tpu.memory_space<vmem>>) attributes {dimension_semantics = [#tpu.dimension_semantics<arbitrary>], iteration_bounds = array<i64: 1>, scalar_prefetch = 0 : i64, scratch_operands = 0 : i64, tpu.core_type = #tpu.core_type<tc>, window_params = [{pipeline_mode = #tpu.pipeline_mode<synchronous>, transform_indices = @transform_0, window_bounds = array<i64: 16, 256>}, {pipeline_mode = #tpu.pipeline_mode<synchronous>, transform_indices = @transform_1, window_bounds = array<i64: 9, 8, 8>}, {pipeline_mode = #tpu.pipeline_mode<synchronous>, transform_indices = @transform_2, window_bounds = array<i64: 8, 1>}, {pipeline_mode = #tpu.pipeline_mode<synchronous>, transform_indices = @transform_3, window_bounds = array<i64: 8, 1>}, {pipeline_mode = #tpu.pipeline_mode<synchronous>, transform_indices = @transform_4, window_bounds = array<i64: 8, 1>}, {pipeline_mode = #tpu.pipeline_mode<synchronous>, transform_indices = @transform_5, window_bounds = array<i64: 1, 256>}, {pipeline_mode = #tpu.pipeline_mode<synchronous>, transform_indices = @transform_6, window_bounds = array<i64: 16, 256>}]} {
    %c0 = arith.constant 0 : index
    %c0_0 = arith.constant 0 : index
    %0 = vector.load %arg1[%c0, %c0_0] : memref<16x256xf32, #tpu.memory_space<vmem>>, vector<16x256xf32>
    %c0_1 = arith.constant 0 : index
    %c0_2 = arith.constant 0 : index
    %1 = vector.load %arg6[%c0_1, %c0_2] : memref<1x256xi32, #tpu.memory_space<vmem>>, vector<1x256xi32>
    %2 = tpu.iota {dimensions = array<i32: 1>} : vector<1x256xi32>
    %c0_3 = arith.constant 0 : index
    %c0_4 = arith.constant 0 : index
    %3 = vector.load %arg3[%c0_3, %c0_4] : memref<8x1xf32, #tpu.memory_space<vmem>>, vector<8x1xf32>
    %c0_5 = arith.constant 0 : index
    %c0_6 = arith.constant 0 : index
    %4 = vector.load %arg4[%c0_5, %c0_6] : memref<8x1xf32, #tpu.memory_space<vmem>>, vector<8x1xf32>
    %c0_7 = arith.constant 0 : index
    %c0_8 = arith.constant 0 : index
    %5 = vector.load %arg5[%c0_7, %c0_8] : memref<8x1xf32, #tpu.memory_space<vmem>>, vector<8x1xf32>
    %cst = arith.constant 0.000000e+00 : f32
    %6 = vector.broadcast %cst : f32 to vector<8x256xf32>
    %cst_9 = arith.constant 0.000000e+00 : f32
    %7 = vector.broadcast %cst_9 : f32 to vector<8x256xf32>
    %c17_i32 = arith.constant 17 : i32
    %8 = tpu.dynamic_rotate %0 by %c17_i32 dim 1 : vector<16x256xf32>, i32 -> vector<16x256xf32>
    %c16_i32 = arith.constant 16 : i32
    %9 = vector.broadcast %c16_i32 : i32 to vector<1x256xi32>
    %10 = arith.cmpi sge, %2, %9 : vector<1x256xi32>
    %c1_i32 = arith.constant 1 : i32
    %11 = vector.broadcast %c1_i32 : i32 to vector<1x256xi32>
    %12 = arith.cmpi sge, %1, %11 : vector<1x256xi32>
    %13 = arith.andi %10, %12 : vector<1x256xi1>
    %cst_10 = arith.constant 0.000000e+00 : f32
    %14 = vector.shape_cast %13 : vector<1x256xi1> to vector<1x256xi1>
    %15 = vector.broadcast %14 : vector<1x256xi1> to vector<16x256xi1>
    %16 = vector.broadcast %cst_10 : f32 to vector<16x256xf32>
    %17 = arith.select %15, %8, %16 : vector<16x256xi1>, vector<16x256xf32>
    %c0_11 = arith.constant 0 : index
    %c0_12 = arith.constant 0 : index
    %c0_13 = arith.constant 0 : index
    %18 = vector.load %arg2[%c0_11, %c0_12, %c0_13] : memref<9x8x8xf32, #tpu.memory_space<vmem>>, vector<1x8x8xf32>
    %19 = vector.shape_cast %18 : vector<1x8x8xf32> to vector<8x8xf32>
    %20 = vector.extract_strided_slice %17 {offsets = [0, 0], sizes = [8, 256], strides = [1, 1]} : vector<16x256xf32> to vector<8x256xf32>
    %cst_14 = arith.constant dense<0.000000e+00> : vector<8x256xf32>
    %21 = tpu.matmul %19, %20, %cst_14 {dimension_numbers = #tpu.dot_dimension_numbers<[1], [0], [0], [1], [0, 0, 1, 1], [], []>} : vector<8x8xf32>, vector<8x256xf32>, vector<8x256xf32> -> vector<8x256xf32>
    %22 = arith.addf %6, %21 : vector<8x256xf32>
    %23 = vector.extract_strided_slice %17 {offsets = [8, 0], sizes = [8, 256], strides = [1, 1]} : vector<16x256xf32> to vector<8x256xf32>
    %cst_15 = arith.constant dense<0.000000e+00> : vector<8x256xf32>
    %24 = tpu.matmul %19, %23, %cst_15 {dimension_numbers = #tpu.dot_dimension_numbers<[1], [0], [0], [1], [0, 0, 1, 1], [], []>} : vector<8x8xf32>, vector<8x256xf32>, vector<8x256xf32> -> vector<8x256xf32>
    %25 = arith.addf %7, %24 : vector<8x256xf32>
    %c16_i32_16 = arith.constant 16 : i32
    %26 = tpu.dynamic_rotate %0 by %c16_i32_16 dim 1 : vector<16x256xf32>, i32 -> vector<16x256xf32>
    %c16_i32_17 = arith.constant 16 : i32
    %27 = vector.broadcast %c16_i32_17 : i32 to vector<1x256xi32>
    %28 = arith.cmpi sge, %2, %27 : vector<1x256xi32>
    %cst_18 = arith.constant 0.000000e+00 : f32
    %29 = vector.shape_cast %28 : vector<1x256xi1> to vector<1x256xi1>
    %30 = vector.broadcast %29 : vector<1x256xi1> to vector<16x256xi1>
    %31 = vector.broadcast %cst_18 : f32 to vector<16x256xf32>
    %32 = arith.select %30, %26, %31 : vector<16x256xi1>, vector<16x256xf32>
    %c1 = arith.constant 1 : index
    %c0_19 = arith.constant 0 : index
    %c0_20 = arith.constant 0 : index
    %33 = vector.load %arg2[%c1, %c0_19, %c0_20] : memref<9x8x8xf32, #tpu.memory_space<vmem>>, vector<1x8x8xf32>
    %34 = vector.shape_cast %33 : vector<1x8x8xf32> to vector<8x8xf32>
    %35 = vector.extract_strided_slice %32 {offsets = [0, 0], sizes = [8, 256], strides = [1, 1]} : vector<16x256xf32> to vector<8x256xf32>
    %cst_21 = arith.constant dense<0.000000e+00> : vector<8x256xf32>
    %36 = tpu.matmul %34, %35, %cst_21 {dimension_numbers = #tpu.dot_dimension_numbers<[1], [0], [0], [1], [0, 0, 1, 1], [], []>} : vector<8x8xf32>, vector<8x256xf32>, vector<8x256xf32> -> vector<8x256xf32>
    %37 = arith.addf %22, %36 : vector<8x256xf32>
    %38 = vector.extract_strided_slice %32 {offsets = [8, 0], sizes = [8, 256], strides = [1, 1]} : vector<16x256xf32> to vector<8x256xf32>
    %cst_22 = arith.constant dense<0.000000e+00> : vector<8x256xf32>
    %39 = tpu.matmul %34, %38, %cst_22 {dimension_numbers = #tpu.dot_dimension_numbers<[1], [0], [0], [1], [0, 0, 1, 1], [], []>} : vector<8x8xf32>, vector<8x256xf32>, vector<8x256xf32> -> vector<8x256xf32>
    %40 = arith.addf %25, %39 : vector<8x256xf32>
    %c15_i32 = arith.constant 15 : i32
    %41 = tpu.dynamic_rotate %0 by %c15_i32 dim 1 : vector<16x256xf32>, i32 -> vector<16x256xf32>
    %c16_i32_23 = arith.constant 16 : i32
    %42 = vector.broadcast %c16_i32_23 : i32 to vector<1x256xi32>
    %43 = arith.cmpi sge, %2, %42 : vector<1x256xi32>
    %c14_i32 = arith.constant 14 : i32
    %44 = vector.broadcast %c14_i32 : i32 to vector<1x256xi32>
    %45 = arith.cmpi sle, %1, %44 : vector<1x256xi32>
    %46 = arith.andi %43, %45 : vector<1x256xi1>
    %cst_24 = arith.constant 0.000000e+00 : f32
    %47 = vector.shape_cast %46 : vector<1x256xi1> to vector<1x256xi1>
    %48 = vector.broadcast %47 : vector<1x256xi1> to vector<16x256xi1>
    %49 = vector.broadcast %cst_24 : f32 to vector<16x256xf32>
    %50 = arith.select %48, %41, %49 : vector<16x256xi1>, vector<16x256xf32>
    %c2 = arith.constant 2 : index
    %c0_25 = arith.constant 0 : index
    %c0_26 = arith.constant 0 : index
    %51 = vector.load %arg2[%c2, %c0_25, %c0_26] : memref<9x8x8xf32, #tpu.memory_space<vmem>>, vector<1x8x8xf32>
    %52 = vector.shape_cast %51 : vector<1x8x8xf32> to vector<8x8xf32>
    %53 = vector.extract_strided_slice %50 {offsets = [0, 0], sizes = [8, 256], strides = [1, 1]} : vector<16x256xf32> to vector<8x256xf32>
    %cst_27 = arith.constant dense<0.000000e+00> : vector<8x256xf32>
    %54 = tpu.matmul %52, %53, %cst_27 {dimension_numbers = #tpu.dot_dimension_numbers<[1], [0], [0], [1], [0, 0, 1, 1], [], []>} : vector<8x8xf32>, vector<8x256xf32>, vector<8x256xf32> -> vector<8x256xf32>
    %55 = arith.addf %37, %54 : vector<8x256xf32>
    %56 = vector.extract_strided_slice %50 {offsets = [8, 0], sizes = [8, 256], strides = [1, 1]} : vector<16x256xf32> to vector<8x256xf32>
    %cst_28 = arith.constant dense<0.000000e+00> : vector<8x256xf32>
    %57 = tpu.matmul %52, %56, %cst_28 {dimension_numbers = #tpu.dot_dimension_numbers<[1], [0], [0], [1], [0, 0, 1, 1], [], []>} : vector<8x8xf32>, vector<8x256xf32>, vector<8x256xf32> -> vector<8x256xf32>
    %58 = arith.addf %40, %57 : vector<8x256xf32>
    %c1_i32_29 = arith.constant 1 : i32
    %59 = tpu.dynamic_rotate %0 by %c1_i32_29 dim 1 : vector<16x256xf32>, i32 -> vector<16x256xf32>
    %c1_i32_30 = arith.constant 1 : i32
    %60 = vector.broadcast %c1_i32_30 : i32 to vector<1x256xi32>
    %61 = arith.cmpi sge, %1, %60 : vector<1x256xi32>
    %cst_31 = arith.constant 0.000000e+00 : f32
    %62 = vector.shape_cast %61 : vector<1x256xi1> to vector<1x256xi1>
    %63 = vector.broadcast %62 : vector<1x256xi1> to vector<16x256xi1>
    %64 = vector.broadcast %cst_31 : f32 to vector<16x256xf32>
    %65 = arith.select %63, %59, %64 : vector<16x256xi1>, vector<16x256xf32>
    %c3 = arith.constant 3 : index
    %c0_32 = arith.constant 0 : index
    %c0_33 = arith.constant 0 : index
    %66 = vector.load %arg2[%c3, %c0_32, %c0_33] : memref<9x8x8xf32, #tpu.memory_space<vmem>>, vector<1x8x8xf32>
    %67 = vector.shape_cast %66 : vector<1x8x8xf32> to vector<8x8xf32>
    %68 = vector.extract_strided_slice %65 {offsets = [0, 0], sizes = [8, 256], strides = [1, 1]} : vector<16x256xf32> to vector<8x256xf32>
    %cst_34 = arith.constant dense<0.000000e+00> : vector<8x256xf32>
    %69 = tpu.matmul %67, %68, %cst_34 {dimension_numbers = #tpu.dot_dimension_numbers<[1], [0], [0], [1], [0, 0, 1, 1], [], []>} : vector<8x8xf32>, vector<8x256xf32>, vector<8x256xf32> -> vector<8x256xf32>
    %70 = arith.addf %55, %69 : vector<8x256xf32>
    %71 = vector.extract_strided_slice %65 {offsets = [8, 0], sizes = [8, 256], strides = [1, 1]} : vector<16x256xf32> to vector<8x256xf32>
    %cst_35 = arith.constant dense<0.000000e+00> : vector<8x256xf32>
    %72 = tpu.matmul %67, %71, %cst_35 {dimension_numbers = #tpu.dot_dimension_numbers<[1], [0], [0], [1], [0, 0, 1, 1], [], []>} : vector<8x8xf32>, vector<8x256xf32>, vector<8x256xf32> -> vector<8x256xf32>
    %73 = arith.addf %58, %72 : vector<8x256xf32>
    %c4 = arith.constant 4 : index
    %c0_36 = arith.constant 0 : index
    %c0_37 = arith.constant 0 : index
    %74 = vector.load %arg2[%c4, %c0_36, %c0_37] : memref<9x8x8xf32, #tpu.memory_space<vmem>>, vector<1x8x8xf32>
    %75 = vector.shape_cast %74 : vector<1x8x8xf32> to vector<8x8xf32>
    %76 = vector.extract_strided_slice %0 {offsets = [0, 0], sizes = [8, 256], strides = [1, 1]} : vector<16x256xf32> to vector<8x256xf32>
    %cst_38 = arith.constant dense<0.000000e+00> : vector<8x256xf32>
    %77 = tpu.matmul %75, %76, %cst_38 {dimension_numbers = #tpu.dot_dimension_numbers<[1], [0], [0], [1], [0, 0, 1, 1], [], []>} : vector<8x8xf32>, vector<8x256xf32>, vector<8x256xf32> -> vector<8x256xf32>
    %78 = arith.addf %70, %77 : vector<8x256xf32>
    %79 = vector.extract_strided_slice %0 {offsets = [8, 0], sizes = [8, 256], strides = [1, 1]} : vector<16x256xf32> to vector<8x256xf32>
    %cst_39 = arith.constant dense<0.000000e+00> : vector<8x256xf32>
    %80 = tpu.matmul %75, %79, %cst_39 {dimension_numbers = #tpu.dot_dimension_numbers<[1], [0], [0], [1], [0, 0, 1, 1], [], []>} : vector<8x8xf32>, vector<8x256xf32>, vector<8x256xf32> -> vector<8x256xf32>
    %81 = arith.addf %73, %80 : vector<8x256xf32>
    %c255_i32 = arith.constant 255 : i32
    %82 = tpu.dynamic_rotate %0 by %c255_i32 dim 1 : vector<16x256xf32>, i32 -> vector<16x256xf32>
    %c14_i32_40 = arith.constant 14 : i32
    %83 = vector.broadcast %c14_i32_40 : i32 to vector<1x256xi32>
    %84 = arith.cmpi sle, %1, %83 : vector<1x256xi32>
    %cst_41 = arith.constant 0.000000e+00 : f32
    %85 = vector.shape_cast %84 : vector<1x256xi1> to vector<1x256xi1>
    %86 = vector.broadcast %85 : vector<1x256xi1> to vector<16x256xi1>
    %87 = vector.broadcast %cst_41 : f32 to vector<16x256xf32>
    %88 = arith.select %86, %82, %87 : vector<16x256xi1>, vector<16x256xf32>
    %c5 = arith.constant 5 : index
    %c0_42 = arith.constant 0 : index
    %c0_43 = arith.constant 0 : index
    %89 = vector.load %arg2[%c5, %c0_42, %c0_43] : memref<9x8x8xf32, #tpu.memory_space<vmem>>, vector<1x8x8xf32>
    %90 = vector.shape_cast %89 : vector<1x8x8xf32> to vector<8x8xf32>
    %91 = vector.extract_strided_slice %88 {offsets = [0, 0], sizes = [8, 256], strides = [1, 1]} : vector<16x256xf32> to vector<8x256xf32>
    %cst_44 = arith.constant dense<0.000000e+00> : vector<8x256xf32>
    %92 = tpu.matmul %90, %91, %cst_44 {dimension_numbers = #tpu.dot_dimension_numbers<[1], [0], [0], [1], [0, 0, 1, 1], [], []>} : vector<8x8xf32>, vector<8x256xf32>, vector<8x256xf32> -> vector<8x256xf32>
    %93 = arith.addf %78, %92 : vector<8x256xf32>
    %94 = vector.extract_strided_slice %88 {offsets = [8, 0], sizes = [8, 256], strides = [1, 1]} : vector<16x256xf32> to vector<8x256xf32>
    %cst_45 = arith.constant dense<0.000000e+00> : vector<8x256xf32>
    %95 = tpu.matmul %90, %94, %cst_45 {dimension_numbers = #tpu.dot_dimension_numbers<[1], [0], [0], [1], [0, 0, 1, 1], [], []>} : vector<8x8xf32>, vector<8x256xf32>, vector<8x256xf32> -> vector<8x256xf32>
    %96 = arith.addf %81, %95 : vector<8x256xf32>
    %c241_i32 = arith.constant 241 : i32
    %97 = tpu.dynamic_rotate %0 by %c241_i32 dim 1 : vector<16x256xf32>, i32 -> vector<16x256xf32>
    %c240_i32 = arith.constant 240 : i32
    %98 = vector.broadcast %c240_i32 : i32 to vector<1x256xi32>
    %99 = arith.cmpi slt, %2, %98 : vector<1x256xi32>
    %c1_i32_46 = arith.constant 1 : i32
    %100 = vector.broadcast %c1_i32_46 : i32 to vector<1x256xi32>
    %101 = arith.cmpi sge, %1, %100 : vector<1x256xi32>
    %102 = arith.andi %99, %101 : vector<1x256xi1>
    %cst_47 = arith.constant 0.000000e+00 : f32
    %103 = vector.shape_cast %102 : vector<1x256xi1> to vector<1x256xi1>
    %104 = vector.broadcast %103 : vector<1x256xi1> to vector<16x256xi1>
    %105 = vector.broadcast %cst_47 : f32 to vector<16x256xf32>
    %106 = arith.select %104, %97, %105 : vector<16x256xi1>, vector<16x256xf32>
    %c6 = arith.constant 6 : index
    %c0_48 = arith.constant 0 : index
    %c0_49 = arith.constant 0 : index
    %107 = vector.load %arg2[%c6, %c0_48, %c0_49] : memref<9x8x8xf32, #tpu.memory_space<vmem>>, vector<1x8x8xf32>
    %108 = vector.shape_cast %107 : vector<1x8x8xf32> to vector<8x8xf32>
    %109 = vector.extract_strided_slice %106 {offsets = [0, 0], sizes = [8, 256], strides = [1, 1]} : vector<16x256xf32> to vector<8x256xf32>
    %cst_50 = arith.constant dense<0.000000e+00> : vector<8x256xf32>
    %110 = tpu.matmul %108, %109, %cst_50 {dimension_numbers = #tpu.dot_dimension_numbers<[1], [0], [0], [1], [0, 0, 1, 1], [], []>} : vector<8x8xf32>, vector<8x256xf32>, vector<8x256xf32> -> vector<8x256xf32>
    %111 = arith.addf %93, %110 : vector<8x256xf32>
    %112 = vector.extract_strided_slice %106 {offsets = [8, 0], sizes = [8, 256], strides = [1, 1]} : vector<16x256xf32> to vector<8x256xf32>
    %cst_51 = arith.constant dense<0.000000e+00> : vector<8x256xf32>
    %113 = tpu.matmul %108, %112, %cst_51 {dimension_numbers = #tpu.dot_dimension_numbers<[1], [0], [0], [1], [0, 0, 1, 1], [], []>} : vector<8x8xf32>, vector<8x256xf32>, vector<8x256xf32> -> vector<8x256xf32>
    %114 = arith.addf %96, %113 : vector<8x256xf32>
    %c240_i32_52 = arith.constant 240 : i32
    %115 = tpu.dynamic_rotate %0 by %c240_i32_52 dim 1 : vector<16x256xf32>, i32 -> vector<16x256xf32>
    %c240_i32_53 = arith.constant 240 : i32
    %116 = vector.broadcast %c240_i32_53 : i32 to vector<1x256xi32>
    %117 = arith.cmpi slt, %2, %116 : vector<1x256xi32>
    %cst_54 = arith.constant 0.000000e+00 : f32
    %118 = vector.shape_cast %117 : vector<1x256xi1> to vector<1x256xi1>
    %119 = vector.broadcast %118 : vector<1x256xi1> to vector<16x256xi1>
    %120 = vector.broadcast %cst_54 : f32 to vector<16x256xf32>
    %121 = arith.select %119, %115, %120 : vector<16x256xi1>, vector<16x256xf32>
    %c7 = arith.constant 7 : index
    %c0_55 = arith.constant 0 : index
    %c0_56 = arith.constant 0 : index
    %122 = vector.load %arg2[%c7, %c0_55, %c0_56] : memref<9x8x8xf32, #tpu.memory_space<vmem>>, vector<1x8x8xf32>
    %123 = vector.shape_cast %122 : vector<1x8x8xf32> to vector<8x8xf32>
    %124 = vector.extract_strided_slice %121 {offsets = [0, 0], sizes = [8, 256], strides = [1, 1]} : vector<16x256xf32> to vector<8x256xf32>
    %cst_57 = arith.constant dense<0.000000e+00> : vector<8x256xf32>
    %125 = tpu.matmul %123, %124, %cst_57 {dimension_numbers = #tpu.dot_dimension_numbers<[1], [0], [0], [1], [0, 0, 1, 1], [], []>} : vector<8x8xf32>, vector<8x256xf32>, vector<8x256xf32> -> vector<8x256xf32>
    %126 = arith.addf %111, %125 : vector<8x256xf32>
    %127 = vector.extract_strided_slice %121 {offsets = [8, 0], sizes = [8, 256], strides = [1, 1]} : vector<16x256xf32> to vector<8x256xf32>
    %cst_58 = arith.constant dense<0.000000e+00> : vector<8x256xf32>
    %128 = tpu.matmul %123, %127, %cst_58 {dimension_numbers = #tpu.dot_dimension_numbers<[1], [0], [0], [1], [0, 0, 1, 1], [], []>} : vector<8x8xf32>, vector<8x256xf32>, vector<8x256xf32> -> vector<8x256xf32>
    %129 = arith.addf %114, %128 : vector<8x256xf32>
    %c239_i32 = arith.constant 239 : i32
    %130 = tpu.dynamic_rotate %0 by %c239_i32 dim 1 : vector<16x256xf32>, i32 -> vector<16x256xf32>
    %c240_i32_59 = arith.constant 240 : i32
    %131 = vector.broadcast %c240_i32_59 : i32 to vector<1x256xi32>
    %132 = arith.cmpi slt, %2, %131 : vector<1x256xi32>
    %c14_i32_60 = arith.constant 14 : i32
    %133 = vector.broadcast %c14_i32_60 : i32 to vector<1x256xi32>
    %134 = arith.cmpi sle, %1, %133 : vector<1x256xi32>
    %135 = arith.andi %132, %134 : vector<1x256xi1>
    %cst_61 = arith.constant 0.000000e+00 : f32
    %136 = vector.shape_cast %135 : vector<1x256xi1> to vector<1x256xi1>
    %137 = vector.broadcast %136 : vector<1x256xi1> to vector<16x256xi1>
    %138 = vector.broadcast %cst_61 : f32 to vector<16x256xf32>
    %139 = arith.select %137, %130, %138 : vector<16x256xi1>, vector<16x256xf32>
    %c8 = arith.constant 8 : index
    %c0_62 = arith.constant 0 : index
    %c0_63 = arith.constant 0 : index
    %140 = vector.load %arg2[%c8, %c0_62, %c0_63] : memref<9x8x8xf32, #tpu.memory_space<vmem>>, vector<1x8x8xf32>
    %141 = vector.shape_cast %140 : vector<1x8x8xf32> to vector<8x8xf32>
    %142 = vector.extract_strided_slice %139 {offsets = [0, 0], sizes = [8, 256], strides = [1, 1]} : vector<16x256xf32> to vector<8x256xf32>
    %cst_64 = arith.constant dense<0.000000e+00> : vector<8x256xf32>
    %143 = tpu.matmul %141, %142, %cst_64 {dimension_numbers = #tpu.dot_dimension_numbers<[1], [0], [0], [1], [0, 0, 1, 1], [], []>} : vector<8x8xf32>, vector<8x256xf32>, vector<8x256xf32> -> vector<8x256xf32>
    %144 = arith.addf %126, %143 : vector<8x256xf32>
    %145 = vector.extract_strided_slice %139 {offsets = [8, 0], sizes = [8, 256], strides = [1, 1]} : vector<16x256xf32> to vector<8x256xf32>
    %cst_65 = arith.constant dense<0.000000e+00> : vector<8x256xf32>
    %146 = tpu.matmul %141, %145, %cst_65 {dimension_numbers = #tpu.dot_dimension_numbers<[1], [0], [0], [1], [0, 0, 1, 1], [], []>} : vector<8x8xf32>, vector<8x256xf32>, vector<8x256xf32> -> vector<8x256xf32>
    %147 = arith.addf %129, %146 : vector<8x256xf32>
    %148 = vector.broadcast %3 : vector<8x1xf32> to vector<8x256xf32>
    %149 = arith.addf %144, %148 : vector<8x256xf32>
    %150 = vector.broadcast %3 : vector<8x1xf32> to vector<8x256xf32>
    %151 = arith.addf %147, %150 : vector<8x256xf32>
    %cst_66 = arith.constant dense<0.000000e+00> : vector<8xf32>
    %152 = vector.multi_reduction <add>, %149, %cst_66 [1] : vector<8x256xf32> to vector<8xf32>
    %153 = vector.shape_cast %152 : vector<8xf32> to vector<8x1xf32>
    %cst_67 = arith.constant 0.000000e+00 : f32
    %154 = vector.broadcast %cst_67 : f32 to vector<8x1xf32>
    %155 = arith.addf %154, %153 : vector<8x1xf32>
    %cst_68 = arith.constant dense<0.000000e+00> : vector<8xf32>
    %156 = vector.multi_reduction <add>, %151, %cst_68 [1] : vector<8x256xf32> to vector<8xf32>
    %157 = vector.shape_cast %156 : vector<8xf32> to vector<8x1xf32>
    %158 = arith.addf %155, %157 : vector<8x1xf32>
    %cst_69 = arith.constant 5.120000e+02 : f32
    %159 = vector.broadcast %cst_69 : f32 to vector<8x1xf32>
    %160 = arith.divf %158, %159 : vector<8x1xf32>
    %161 = vector.broadcast %160 : vector<8x1xf32> to vector<8x256xf32>
    %162 = arith.subf %149, %161 : vector<8x256xf32>
    %163 = arith.mulf %162, %162 : vector<8x256xf32>
    %cst_70 = arith.constant dense<0.000000e+00> : vector<8xf32>
    %164 = vector.multi_reduction <add>, %163, %cst_70 [1] : vector<8x256xf32> to vector<8xf32>
    %165 = vector.shape_cast %164 : vector<8xf32> to vector<8x1xf32>
    %cst_71 = arith.constant 0.000000e+00 : f32
    %166 = vector.broadcast %cst_71 : f32 to vector<8x1xf32>
    %167 = arith.addf %166, %165 : vector<8x1xf32>
    %168 = vector.broadcast %160 : vector<8x1xf32> to vector<8x256xf32>
    %169 = arith.subf %151, %168 : vector<8x256xf32>
    %170 = arith.mulf %169, %169 : vector<8x256xf32>
    %cst_72 = arith.constant dense<0.000000e+00> : vector<8xf32>
    %171 = vector.multi_reduction <add>, %170, %cst_72 [1] : vector<8x256xf32> to vector<8xf32>
    %172 = vector.shape_cast %171 : vector<8xf32> to vector<8x1xf32>
    %173 = arith.addf %167, %172 : vector<8x1xf32>
    %cst_73 = arith.constant 5.120000e+02 : f32
    %174 = vector.broadcast %cst_73 : f32 to vector<8x1xf32>
    %175 = arith.divf %173, %174 : vector<8x1xf32>
    %cst_74 = arith.constant 9.99999974E-6 : f32
    %176 = vector.broadcast %cst_74 : f32 to vector<8x1xf32>
    %177 = arith.addf %175, %176 : vector<8x1xf32>
    %178 = math.rsqrt %177 : vector<8x1xf32>
    %179 = arith.mulf %4, %178 : vector<8x1xf32>
    %180 = arith.mulf %160, %179 : vector<8x1xf32>
    %181 = arith.subf %5, %180 : vector<8x1xf32>
    %182 = vector.extract_strided_slice %0 {offsets = [0, 0], sizes = [8, 256], strides = [1, 1]} : vector<16x256xf32> to vector<8x256xf32>
    %183 = vector.broadcast %179 : vector<8x1xf32> to vector<8x256xf32>
    %184 = arith.mulf %149, %183 : vector<8x256xf32>
    %185 = vector.broadcast %181 : vector<8x1xf32> to vector<8x256xf32>
    %186 = arith.addf %184, %185 : vector<8x256xf32>
    %cst_75 = arith.constant 0.000000e+00 : f32
    %187 = vector.broadcast %cst_75 : f32 to vector<8x256xf32>
    %188 = arith.maximumf %186, %187 : vector<8x256xf32>
    %189 = arith.addf %188, %182 : vector<8x256xf32>
    %c0_76 = arith.constant 0 : index
    %c0_77 = arith.constant 0 : index
    %190 = vector.load %arg7[%c0_76, %c0_77] : memref<16x256xf32, #tpu.memory_space<vmem>>, vector<8x256xf32>
    tpu.vector_store %arg7[%c0_76, %c0_77], %189 {strides = array<i32>} : memref<16x256xf32, #tpu.memory_space<vmem>>, vector<8x256xf32>,
    %191 = vector.extract_strided_slice %0 {offsets = [8, 0], sizes = [8, 256], strides = [1, 1]} : vector<16x256xf32> to vector<8x256xf32>
    %192 = vector.broadcast %179 : vector<8x1xf32> to vector<8x256xf32>
    %193 = arith.mulf %151, %192 : vector<8x256xf32>
    %194 = vector.broadcast %181 : vector<8x1xf32> to vector<8x256xf32>
    %195 = arith.addf %193, %194 : vector<8x256xf32>
    %cst_78 = arith.constant 0.000000e+00 : f32
    %196 = vector.broadcast %cst_78 : f32 to vector<8x256xf32>
    %197 = arith.maximumf %195, %196 : vector<8x256xf32>
    %198 = arith.addf %197, %191 : vector<8x256xf32>
    %c8_79 = arith.constant 8 : index
    %c0_80 = arith.constant 0 : index
    %199 = vector.load %arg7[%c8_79, %c0_80] : memref<16x256xf32, #tpu.memory_space<vmem>>, vector<8x256xf32>
    tpu.vector_store %arg7[%c8_79, %c0_80], %198 {strides = array<i32>} : memref<16x256xf32, #tpu.memory_space<vmem>>, vector<8x256xf32>,
    return
  }
  func.func @transform_0(%arg0: i32) -> (i32, i32) {
    %c0_i32 = arith.constant 0 : i32
    %c0_i32_0 = arith.constant 0 : i32
    %c0_i32_1 = arith.constant 0 : i32
    return %c0_i32, %c0_i32_0 : i32, i32
  }
  func.func @transform_1(%arg0: i32) -> (i32, i32, i32) {
    %c0_i32 = arith.constant 0 : i32
    %c0_i32_0 = arith.constant 0 : i32
    %c0_i32_1 = arith.constant 0 : i32
    %c0_i32_2 = arith.constant 0 : i32
    return %c0_i32, %c0_i32_0, %c0_i32_1 : i32, i32, i32
  }
  func.func @transform_2(%arg0: i32) -> (i32, i32) {
    %c0_i32 = arith.constant 0 : i32
    %c0_i32_0 = arith.constant 0 : i32
    %c0_i32_1 = arith.constant 0 : i32
    return %c0_i32, %c0_i32_0 : i32, i32
  }
  func.func @transform_3(%arg0: i32) -> (i32, i32) {
    %c0_i32 = arith.constant 0 : i32
    %c0_i32_0 = arith.constant 0 : i32
    %c0_i32_1 = arith.constant 0 : i32
    return %c0_i32, %c0_i32_0 : i32, i32
  }
  func.func @transform_4(%arg0: i32) -> (i32, i32) {
    %c0_i32 = arith.constant 0 : i32
    %c0_i32_0 = arith.constant 0 : i32
    %c0_i32_1 = arith.constant 0 : i32
    return %c0_i32, %c0_i32_0 : i32, i32
  }
  func.func @transform_5(%arg0: i32) -> (i32, i32) {
    %c0_i32 = arith.constant 0 : i32
    %c0_i32_0 = arith.constant 0 : i32
    %c0_i32_1 = arith.constant 0 : i32
    return %c0_i32, %c0_i32_0 : i32, i32
  }
  func.func @transform_6(%arg0: i32) -> (i32, i32) {
    %c0_i32 = arith.constant 0 : i32
    %c0_i32_0 = arith.constant 0 : i32
    %c0_i32_1 = arith.constant 0 : i32
    return %c0_i32, %c0_i32_0 : i32, i32
  }
}

</mosaic_0001>

<llo_original>
// kernel: tile.9
$region0: #{tile.9}
  %s0 = inlined_call_operand.vmem [shape: s32[16,16], index: 0, kind: input, shape index: {}]
  %s1 = inlined_call_operand.vmem [shape: s32[1,256], index: 1, kind: output, shape index: {}]
  $region1: #{tile.9} parent=0
    #allocation0 [shape = 'u8[8192]{0}', space=vmem, size = 0x2000, scoped, tag = 'scoped mem for output reshape']
    %s2 = smov 3
    %v3 = vld [vmem:[%s0] ss:$8 sm:%s2]
    %vm4 = vcmask 130048
    %5 = vst.msk [vmem:[#allocation0] ss:$8 sm:$0x3] %vm4, %v3
    %s6 = scalar_lea.vmem %s0, 7
    %s7 = smov 3
    %v8 = vld [vmem:[%s6] ss:$8 sm:%s7]
    %9 = vrot.lane.b32.xlu0 %v8, 112
    %v10 = vpop.permute.xlu0 %9
    %vm11 = vcmask 1048448
    %12 = vst.msk [vmem:[#allocation0] ss:$8 sm:$0x3] %vm11, %v10
    %s13 = scalar_lea.vmem %s0, 6
    %s14 = smov 3
    %v15 = vld [vmem:[%s13] ss:$8 sm:%s14]
    %16 = vrot.lane.b32.xlu0 %v15, 96
    %v17 = vpop.permute.xlu0 %16
    %vm18 = vcmask 917248
    %19 = vst.msk [vmem:[#allocation0] ss:$8 sm:$0x3] %vm18, %v17
    %s20 = scalar_lea.vmem %s0, 5
    %s21 = smov 3
    %v22 = vld [vmem:[%s20] ss:$8 sm:%s21]
    %23 = vrot.lane.b32.xlu0 %v22, 80
    %v24 = vpop.permute.xlu0 %23
    %vm25 = vcmask 786048
    %26 = vst.msk [vmem:[#allocation0] ss:$8 sm:$0x3] %vm25, %v24
    %s27 = scalar_lea.vmem %s0, 4
    %s28 = smov 3
    %v29 = vld [vmem:[%s27] ss:$8 sm:%s28]
    %30 = vrot.lane.b32.xlu0 %v29, 64
    %v31 = vpop.permute.xlu0 %30
    %vm32 = vcmask 654848
    %33 = vst.msk [vmem:[#allocation0] ss:$8 sm:$0x3] %vm32, %v31
    %s34 = scalar_lea.vmem %s0, 3
    %s35 = smov 3
    %v36 = vld [vmem:[%s34] ss:$8 sm:%s35]
    %37 = vrot.lane.b32.xlu0 %v36, 48
    %v38 = vpop.permute.xlu0 %37
    %vm39 = vcmask 523648
    %40 = vst.msk [vmem:[#allocation0] ss:$8 sm:$0x3] %vm39, %v38
    %s41 = scalar_lea.vmem %s0, 2
    %s42 = smov 3
    %v43 = vld [vmem:[%s41] ss:$8 sm:%s42]
    %44 = vrot.lane.b32.xlu0 %v43, 32
    %v45 = vpop.permute.xlu0 %44
    %vm46 = vcmask 392448
    %47 = vst.msk [vmem:[#allocation0] ss:$8 sm:$0x3] %vm46, %v45
    %s48 = scalar_lea.vmem %s0, 1
    %s49 = smov 3
    %v50 = vld [vmem:[%s48] ss:$8 sm:%s49]
    %51 = vrot.lane.b32.xlu0 %v50, 16
    %v52 = vpop.permute.xlu0 %51
    %vm53 = vcmask 261248
    %54 = vst.msk [vmem:[#allocation0] ss:$8 sm:$0x3] %vm53, %v52
    %s56 = sshllo.u32 0, 1
    %v58 = vld [vmem:[#allocation0] sm:%s56]
    %s59 = sshllo.u32 0, 1
    %60 = vst [vmem:[%s1] sm:%s59] %v58
    %s61 = scalar_lea.vmem [#allocation0], 8
    %v62 = vld [vmem:[%s61] sm:%s56]
    %s63 = sshllo.u32 0, 1
    %s64 = scalar_lea.vmem %s1, 1
    %65 = vst [vmem:[%s64] sm:%s63] %v62

// kernel: residual_forward.1
$region0: #{residual_forward.1}
  #allocation0 [shape = 'u32[]', space=smem, size = 0x4, offset = 0x4, fixed_abs, tag = 'smem constant byte address 0x4 - core index']
  #allocation1 [shape = 'u32[144,128]{1,0:T(1,128)}', space=vmem, size = 0x12000, scoped, tag = 'internal scratch']
  %s0 = inlined_call_operand.vmem [shape: f32[16,256], index: 0, kind: input, shape index: {}]
  %s1 = inlined_call_operand.vmem [shape: f32[9,8,8], index: 1, kind: input, shape index: {}]
  %s2 = inlined_call_operand.vmem [shape: f32[8,1], index: 2, kind: input, shape index: {}]
  %s3 = inlined_call_operand.vmem [shape: f32[8,1], index: 3, kind: input, shape index: {}]
  %s4 = inlined_call_operand.vmem [shape: f32[8,1], index: 4, kind: input, shape index: {}]
  %s5 = inlined_call_operand.vmem [shape: s32[1,256], index: 5, kind: input, shape index: {}]
  %s6 = inlined_call_operand.vmem [shape: f32[16,256], index: 6, kind: output, shape index: {}]
  %s7 = sld [smem:[#allocation0]]
  $region34: #{residual_forward.1} parent=0
    _
  %s9 = ssub.s32 1, %s7
  %s10 = scalar_select 0, %s9, %s7
  // Predicated region
  $region2: #{residual_forward.1} parent=0 // pred_check
    _
  $region3: #{residual_forward.1} parent=0 // pred_check_branch
    %12 = sbr.rel (0) target = $region5
  $region4: #{residual_forward.1} parent=0 // pred_region
    _
  $region5: #{residual_forward.1} parent=0 // pred_fallthru
    _
  // Predicated region
  $region6: #{residual_forward.1} parent=0 // pred_check
    _
  $region7: #{residual_forward.1} parent=0 // pred_check_branch
    %14 = sbr.rel (0) target = $region9
  $region8: #{residual_forward.1} parent=0 // pred_region
    _
  $region9: #{residual_forward.1} parent=0 // pred_fallthru
    _
  // Predicated region
  $region10: #{residual_forward.1} parent=0 // pred_check
    _
  $region11: #{residual_forward.1} parent=0 // pred_check_branch
    %16 = sbr.rel (0) target = $region13
  $region12: #{residual_forward.1} parent=0 // pred_region
    _
  $region13: #{residual_forward.1} parent=0 // pred_fallthru
    _
  // Predicated region
  $region14: #{residual_forward.1} parent=0 // pred_check
    _
  $region15: #{residual_forward.1} parent=0 // pred_check_branch
    %18 = sbr.rel (0) target = $region17
  $region16: #{residual_forward.1} parent=0 // pred_region
    _
  $region17: #{residual_forward.1} parent=0 // pred_fallthru
    _
  // Predicated region
  $region18: #{residual_forward.1} parent=0 // pred_check
    _
  $region19: #{residual_forward.1} parent=0 // pred_check_branch
    %20 = sbr.rel (0) target = $region21
  $region20: #{residual_forward.1} parent=0 // pred_region
    _
  $region21: #{residual_forward.1} parent=0 // pred_fallthru
    _
  // Predicated region
  $region22: #{residual_forward.1} parent=0 // pred_check
    _
  $region23: #{residual_forward.1} parent=0 // pred_check_branch
    %22 = sbr.rel (0) target = $region25
  $region24: #{residual_forward.1} parent=0 // pred_region
    _
  $region25: #{residual_forward.1} parent=0 // pred_fallthru
    _
  %v23 = vld [vmem:[%s0] sm:$0xff]
  %v24 = vld [vmem:[%s0 + $0x8] sm:$0xff]
  %v25 = vld [vmem:[%s0 + $0x10] sm:$0xff]
  %v26 = vld [vmem:[%s0 + $0x18] sm:$0xff]
  %v27 = vld [vmem:[%s5] sm:$0x3]
  %v28 = vlaneseq
  %v29 = vand.u32 %v28, 127
  %v30 = vadd.s32 %v29, 128
  %v31 = vld [vmem:[%s2] sm:$0xff]
  %v32 = vld [vmem:[%s3] sm:$0xff]
  %v33 = vld [vmem:[%s4] sm:$0xff]
  %34 = vrot.lane.b32.xlu0 %v23, 17
  %v35 = vpop.permute.xlu0 %34
  %36 = vrot.lane.b32.xlu0 %v25, 17
  %v37 = vpop.permute.xlu0 %36
  %38 = vrot.lane.b32.xlu0 %v24, 17
  %v39 = vpop.permute.xlu0 %38
  %40 = vrot.lane.b32.xlu0 %v26, 17
  %v41 = vpop.permute.xlu0 %40
  %vm42 = vcmp.lt.s32.totalorder %v29, 17
  %v43 = vsel %vm42, %v35, %v39
  %v44 = vsel %vm42, %v37, %v41
  %v45 = vsel %vm42, %v39, %v35
  %v46 = vsel %vm42, %v41, %v37
  %vm47 = vcmp.ge.s32.totalorder %v29, 16
  %vm48 = vcmp.ge.s32.totalorder %v30, 16
  %vm49 = vcmp.ge.s32.totalorder %v27, 1
  %v50 = vsel %vm49, 1, 0
  %v51 = vlaneseq
  %v52 = vshrl.u32 %v51, 7
  %v53 = vsub.s32 0, %v52
  %v54 = vrot.slane %v50, %v53
  %v55 = vlaneseq
  %v56 = vshrl.u32 %v55, 7
  %v57 = vsub.s32 1, %v56
  %v58 = vrot.slane %v50, %v57
  %vm59 = vcmp.ne.s32.totalorder %v54, 0
  %vm60 = vcmp.ne.s32.totalorder %v58, 0
  %vm61 = vmand %vm47, %vm59
  %vm62 = vmand %vm48, %vm60
  %v63 = vsel %vm61, 1, 0
  %v64 = vsel %vm62, 1, 0
  %v65 = vlaneseq
  %v66 = vshrl.u32 %v65, 7
  %v67 = vsub.s32 0, %v66
  %v68 = vrot.slane %v63, %v67
  %v69 = vlaneseq
  %v70 = vshrl.u32 %v69, 7
  %v71 = vsub.s32 0, %v70
  %v72 = vrot.slane %v64, %v71
  %vm73 = vcmp.eq.s32.totalorder %v68, 1
  %vm74 = vcmp.eq.s32.totalorder %v72, 1
  %v75 = vsel %vm73, %v45, 0.0
  %v76 = vsel %vm74, %v43, 0.0
  %v77 = vsel %vm73, %v46, 0.0
  %v78 = vsel %vm74, %v44, 0.0
  %v79 = vld [vmem:[%s1] sm:$0xff]
  %80 = vrot.lane.b32.xlu0 %v23, 16
  %v81 = vpop.permute.xlu0 %80
  %82 = vrot.lane.b32.xlu0 %v25, 16
  %v83 = vpop.permute.xlu0 %82
  %84 = vrot.lane.b32.xlu0 %v24, 16
  %v85 = vpop.permute.xlu0 %84
  %86 = vrot.lane.b32.xlu0 %v26, 16
  %v87 = vpop.permute.xlu0 %86
  %vm88 = vcmp.lt.s32.totalorder %v29, 16
  %v89 = vsel %vm88, %v81, %v85
  %v90 = vsel %vm88, %v83, %v87
  %v91 = vsel %vm88, %v85, %v81
  %v92 = vsel %vm88, %v87, %v83
  %v93 = vsel %vm47, 1, 0
  %v94 = vsel %vm48, 1, 0
  %vm95 = vcmp.eq.s32.totalorder %v93, 1
  %vm96 = vcmp.eq.s32.totalorder %v94, 1
  %v97 = vsel %vm95, %v91, 0.0
  %v98 = vsel %vm96, %v89, 0.0
  %v99 = vsel %vm95, %v92, 0.0
  %v100 = vsel %vm96, %v90, 0.0
  %s101 = scalar_lea.vmem %s1, 8
  %v102 = vld [vmem:[%s101] sm:$0xff]
  %vm103 = vcmask 64512
  %v105 = vsel %vm103, %v102, 0
  %107 = vmatprep.subr.mxu0 %v98
  %108 = vmatpush1.msra.mxu0 %v97
  %109 = vmatprep.subr.mxu0 0.0
  %110 = vmatpush1.msra.mxu0 0.0
  %111 = vmatprep.subr.mxu0 0.0
  %112 = vmatpush1.msra.mxu0 0.0
  %113 = vmatprep.subr.mxu0 0.0
  %114 = vmatpush1.msra.mxu0 0.0
  %115 = vmatprep.subr.mxu0 0.0
  %116 = vmatpush1.msra.mxu0 0.0
  %117 = vmatprep.subr.mxu0 0.0
  %118 = vmatpush1.msra.mxu0 0.0
  %119 = vmatprep.subr.mxu0 0.0
  %120 = vmatpush1.msra.mxu0 0.0
  %121 = vmatprep.subr.mxu0 0.0
  %122 = vmatpush1.msra.mxu0 0.0
  %123 = vmatprep.subr.mxu0 0.0
  %124 = vmatpush1.msra.mxu0 0.0
  %125 = vmatprep.subr.mxu0 0.0
  %126 = vmatpush1.msra.mxu0 0.0
  %127 = vmatprep.subr.mxu0 0.0
  %128 = vmatpush1.msra.mxu0 0.0
  %129 = vmatprep.subr.mxu0 0.0
  %130 = vmatpush1.msra.mxu0 0.0
  %131 = vmatprep.subr.mxu0 0.0
  %132 = vmatpush1.msra.mxu0 0.0
  %133 = vmatprep.subr.mxu0 0.0
  %134 = vmatpush1.msra.mxu0 0.0
  %135 = vmatprep.subr.mxu0 0.0
  %136 = vmatpush1.msra.mxu0 0.0
  %137 = vmatprep.subr.mxu0 0.0
  %138 = vmatpush1.msra.mxu0 0.0
  %139 = vmatprep.subr.mxu0 0.0
  %140 = vmatpush1.msra.mxu0 0.0
  %141 = vmatprep.subr.mxu0 0.0
  %142 = vmatpush1.msra.mxu0 0.0
  %143 = vmatprep.subr.mxu0 0.0
  %144 = vmatpush1.msra.mxu0 0.0
  %145 = vmatprep.subr.mxu0 0.0
  %146 = vmatpush1.msra.mxu0 0.0
  %147 = vmatprep.subr.mxu0 0.0
  %148 = vmatpush1.msra.mxu0 0.0
  %149 = vmatprep.subr.mxu0 0.0
  %150 = vmatpush1.msra.mxu0 0.0
  %151 = vmatprep.subr.mxu0 0.0
  %152 = vmatpush1.msra.mxu0 0.0
  %153 = vmatprep.subr.mxu0 0.0
  %154 = vmatpush1.msra.mxu0 0.0
  %155 = vmatprep.subr.mxu0 0.0
  %156 = vmatpush1.msra.mxu0 0.0
  %157 = vmatprep.subr.mxu0 0.0
  %158 = vmatpush1.msra.mxu0 0.0
  %159 = vmatprep.subr.mxu0 0.0
  %160 = vmatpush1.msra.mxu0 0.0
  %161 = vmatprep.subr.mxu0 0.0
  %162 = vmatpush1.msra.mxu0 0.0
  %163 = vmatprep.subr.mxu0 0.0
  %164 = vmatpush1.msra.mxu0 0.0
  %165 = vmatprep.subr.mxu0 0.0
  %166 = vmatpush1.msra.mxu0 0.0
  %167 = vmatprep.subr.mxu0 0.0
  %168 = vmatpush1.msra.mxu0 0.0
  %169 = vmatprep.subr.mxu0 0.0
  %170 = vmatpush1.msra.mxu0 0.0
  %171 = vmatprep.mubr.f32.mxu0 0.0
  %172 = vmatmul.mubr.f32.gmra.mrb[0].mxu0 %v105
  %v173 = vpop.f32.mrb[0].mxu0
  %v174 = vadd.f32 0.0, %v173
  %v175 = vpop.f32.mrb[0].mxu0
  %v176 = vadd.f32 0.0, %v175
  %177 = vdwg.mxu0
  %v179 = vsel %vm103, %v79, 0
  %181 = vmatprep.subr.mxu0 %v76
  %182 = vmatpush1.msra.mxu0 %v75
  %183 = vmatprep.subr.mxu0 0.0
  %184 = vmatpush1.msra.mxu0 0.0
  %185 = vmatprep.subr.mxu0 0.0
  %186 = vmatpush1.msra.mxu0 0.0
  %187 = vmatprep.subr.mxu0 0.0
  %188 = vmatpush1.msra.mxu0 0.0
  %189 = vmatprep.subr.mxu0 0.0
  %190 = vmatpush1.msra.mxu0 0.0
  %191 = vmatprep.subr.mxu0 0.0
  %192 = vmatpush1.msra.mxu0 0.0
  %193 = vmatprep.subr.mxu0 0.0
  %194 = vmatpush1.msra.mxu0 0.0
  %195 = vmatprep.subr.mxu0 0.0
  %196 = vmatpush1.msra.mxu0 0.0
  %197 = vmatprep.subr.mxu0 0.0
  %198 = vmatpush1.msra.mxu0 0.0
  %199 = vmatprep.subr.mxu0 0.0
  %200 = vmatpush1.msra.mxu0 0.0
  %201 = vmatprep.subr.mxu0 0.0
  %202 = vmatpush1.msra.mxu0 0.0
  %203 = vmatprep.subr.mxu0 0.0
  %204 = vmatpush1.msra.mxu0 0.0
  %205 = vmatprep.subr.mxu0 0.0
  %206 = vmatpush1.msra.mxu0 0.0
  %207 = vmatprep.subr.mxu0 0.0
  %208 = vmatpush1.msra.mxu0 0.0
  %209 = vmatprep.subr.mxu0 0.0
  %210 = vmatpush1.msra.mxu0 0.0
  %211 = vmatprep.subr.mxu0 0.0
  %212 = vmatpush1.msra.mxu0 0.0
  %213 = vmatprep.subr.mxu0 0.0
  %214 = vmatpush1.msra.mxu0 0.0
  %215 = vmatprep.subr.mxu0 0.0
  %216 = vmatpush1.msra.mxu0 0.0
  %217 = vmatprep.subr.mxu0 0.0
  %218 = vmatpush1.msra.mxu0 0.0
  %219 = vmatprep.subr.mxu0 0.0
  %220 = vmatpush1.msra.mxu0 0.0
  %221 = vmatprep.subr.mxu0 0.0
  %222 = vmatpush1.msra.mxu0 0.0
  %223 = vmatprep.subr.mxu0 0.0
  %224 = vmatpush1.msra.mxu0 0.0
  %225 = vmatprep.subr.mxu0 0.0
  %226 = vmatpush1.msra.mxu0 0.0
  %227 = vmatprep.subr.mxu0 0.0
  %228 = vmatpush1.msra.mxu0 0.0
  %229 = vmatprep.subr.mxu0 0.0
  %230 = vmatpush1.msra.mxu0 0.0
  %231 = vmatprep.subr.mxu0 0.0
  %232 = vmatpush1.msra.mxu0 0.0
  %233 = vmatprep.subr.mxu0 0.0
  %234 = vmatpush1.msra.mxu0 0.0
  %235 = vmatprep.subr.mxu0 0.0
  %236 = vmatpush1.msra.mxu0 0.0
  %237 = vmatprep.subr.mxu0 0.0
  %238 = vmatpush1.msra.mxu0 0.0
  %239 = vmatprep.subr.mxu0 0.0
  %240 = vmatpush1.msra.mxu0 0.0
  %241 = vmatprep.subr.mxu0 0.0
  %242 = vmatpush1.msra.mxu0 0.0
  %243 = vmatprep.subr.mxu0 0.0
  %244 = vmatpush1.msra.mxu0 0.0
  %245 = vmatprep.mubr.f32.mxu0 0.0
  %246 = vmatmul.mubr.f32.gmra.mrb[0].mxu0 %v179
  %v247 = vpop.f32.mrb[0].mxu0
  %v248 = vadd.f32 %v174, %v247
  %v249 = vpop.f32.mrb[0].mxu0
  %v250 = vadd.f32 %v176, %v249
  %251 = vdwg.mxu0
  %252 = vmatprep.subr.mxu0 %v100
  %253 = vmatpush1.msra.mxu0 %v99
  %254 = vmatprep.subr.mxu0 0.0
  %255 = vmatpush1.msra.mxu0 0.0
  %256 = vmatprep.subr.mxu0 0.0
  %257 = vmatpush1.msra.mxu0 0.0
  %258 = vmatprep.subr.mxu0 0.0
  %259 = vmatpush1.msra.mxu0 0.0
  %260 = vmatprep.subr.mxu0 0.0
  %261 = vmatpush1.msra.mxu0 0.0
  %262 = vmatprep.subr.mxu0 0.0
  %263 = vmatpush1.msra.mxu0 0.0
  %264 = vmatprep.subr.mxu0 0.0
  %265 = vmatpush1.msra.mxu0 0.0
  %266 = vmatprep.subr.mxu0 0.0
  %267 = vmatpush1.msra.mxu0 0.0
  %268 = vmatprep.subr.mxu0 0.0
  %269 = vmatpush1.msra.mxu0 0.0
  %270 = vmatprep.subr.mxu0 0.0
  %271 = vmatpush1.msra.mxu0 0.0
  %272 = vmatprep.subr.mxu0 0.0
  %273 = vmatpush1.msra.mxu0 0.0
  %274 = vmatprep.subr.mxu0 0.0
  %275 = vmatpush1.msra.mxu0 0.0
  %276 = vmatprep.subr.mxu0 0.0
  %277 = vmatpush1.msra.mxu0 0.0
  %278 = vmatprep.subr.mxu0 0.0
  %279 = vmatpush1.msra.mxu0 0.0
  %280 = vmatprep.subr.mxu0 0.0
  %281 = vmatpush1.msra.mxu0 0.0
  %282 = vmatprep.subr.mxu0 0.0
  %283 = vmatpush1.msra.mxu0 0.0
  %284 = vmatprep.subr.mxu0 0.0
  %285 = vmatpush1.msra.mxu0 0.0
  %286 = vmatprep.subr.mxu0 0.0
  %287 = vmatpush1.msra.mxu0 0.0
  %288 = vmatprep.subr.mxu0 0.0
  %289 = vmatpush1.msra.mxu0 0.0
  %290 = vmatprep.subr.mxu0 0.0
  %291 = vmatpush1.msra.mxu0 0.0
  %292 = vmatprep.subr.mxu0 0.0
  %293 = vmatpush1.msra.mxu0 0.0
  %294 = vmatprep.subr.mxu0 0.0
  %295 = vmatpush1.msra.mxu0 0.0
  %296 = vmatprep.subr.mxu0 0.0
  %297 = vmatpush1.msra.mxu0 0.0
  %298 = vmatprep.subr.mxu0 0.0
  %299 = vmatpush1.msra.mxu0 0.0
  %300 = vmatprep.subr.mxu0 0.0
  %301 = vmatpush1.msra.mxu0 0.0
  %302 = vmatprep.subr.mxu0 0.0
  %303 = vmatpush1.msra.mxu0 0.0
  %304 = vmatprep.subr.mxu0 0.0
  %305 = vmatpush1.msra.mxu0 0.0
  %306 = vmatprep.subr.mxu0 0.0
  %307 = vmatpush1.msra.mxu0 0.0
  %308 = vmatprep.subr.mxu0 0.0
  %309 = vmatpush1.msra.mxu0 0.0
  %310 = vmatprep.subr.mxu0 0.0
  %311 = vmatpush1.msra.mxu0 0.0
  %312 = vmatprep.subr.mxu0 0.0
  %313 = vmatpush1.msra.mxu0 0.0
  %314 = vmatprep.subr.mxu0 0.0
  %315 = vmatpush1.msra.mxu0 0.0
  %316 = vmatprep.mubr.f32.mxu0 0.0
  %317 = vmatmul.mubr.f32.gmra.mrb[0].mxu0 %v105
  %v318 = vpop.f32.mrb[0].mxu0
  %v319 = vadd.f32 0.0, %v318
  %v320 = vpop.f32.mrb[0].mxu0
  %v321 = vadd.f32 0.0, %v320
  %322 = vdwg.mxu0
  %323 = vmatprep.subr.mxu0 %v78
  %324 = vmatpush1.msra.mxu0 %v77
  %325 = vmatprep.subr.mxu0 0.0
  %326 = vmatpush1.msra.mxu0 0.0
  %327 = vmatprep.subr.mxu0 0.0
  %328 = vmatpush1.msra.mxu0 0.0
  %329 = vmatprep.subr.mxu0 0.0
  %330 = vmatpush1.msra.mxu0 0.0
  %331 = vmatprep.subr.mxu0 0.0
  %332 = vmatpush1.msra.mxu0 0.0
  %333 = vmatprep.subr.mxu0 0.0
  %334 = vmatpush1.msra.mxu0 0.0
  %335 = vmatprep.subr.mxu0 0.0
  %336 = vmatpush1.msra.mxu0 0.0
  %337 = vmatprep.subr.mxu0 0.0
  %338 = vmatpush1.msra.mxu0 0.0
  %339 = vmatprep.subr.mxu0 0.0
  %340 = vmatpush1.msra.mxu0 0.0
  %341 = vmatprep.subr.mxu0 0.0
  %342 = vmatpush1.msra.mxu0 0.0
  %343 = vmatprep.subr.mxu0 0.0
  %344 = vmatpush1.msra.mxu0 0.0
  %345 = vmatprep.subr.mxu0 0.0
  %346 = vmatpush1.msra.mxu0 0.0
  %347 = vmatprep.subr.mxu0 0.0
  %348 = vmatpush1.msra.mxu0 0.0
  %349 = vmatprep.subr.mxu0 0.0
  %350 = vmatpush1.msra.mxu0 0.0
  %351 = vmatprep.subr.mxu0 0.0
  %352 = vmatpush1.msra.mxu0 0.0
  %353 = vmatprep.subr.mxu0 0.0
  %354 = vmatpush1.msra.mxu0 0.0
  %355 = vmatprep.subr.mxu0 0.0
  %356 = vmatpush1.msra.mxu0 0.0
  %357 = vmatprep.subr.mxu0 0.0
  %358 = vmatpush1.msra.mxu0 0.0
  %359 = vmatprep.subr.mxu0 0.0
  %360 = vmatpush1.msra.mxu0 0.0
  %361 = vmatprep.subr.mxu0 0.0
  %362 = vmatpush1.msra.mxu0 0.0
  %363 = vmatprep.subr.mxu0 0.0
  %364 = vmatpush1.msra.mxu0 0.0
  %365 = vmatprep.subr.mxu0 0.0
  %366 = vmatpush1.msra.mxu0 0.0
  %367 = vmatprep.subr.mxu0 0.0
  %368 = vmatpush1.msra.mxu0 0.0
  %369 = vmatprep.subr.mxu0 0.0
  %370 = vmatpush1.msra.mxu0 0.0
  %371 = vmatprep.subr.mxu0 0.0
  %372 = vmatpush1.msra.mxu0 0.0
  %373 = vmatprep.subr.mxu0 0.0
  %374 = vmatpush1.msra.mxu0 0.0
  %375 = vmatprep.subr.mxu0 0.0
  %376 = vmatpush1.msra.mxu0 0.0
  %377 = vmatprep.subr.mxu0 0.0
  %378 = vmatpush1.msra.mxu0 0.0
  %379 = vmatprep.subr.mxu0 0.0
  %380 = vmatpush1.msra.mxu0 0.0
  %381 = vmatprep.subr.mxu0 0.0
  %382 = vmatpush1.msra.mxu0 0.0
  %383 = vmatprep.subr.mxu0 0.0
  %384 = vmatpush1.msra.mxu0 0.0
  %385 = vmatprep.subr.mxu0 0.0
  %386 = vmatpush1.msra.mxu0 0.0
  %387 = vmatprep.mubr.f32.mxu0 0.0
  %388 = vmatmul.mubr.f32.gmra.mrb[0].mxu0 %v179
  %v389 = vpop.f32.mrb[0].mxu0
  %v390 = vadd.f32 %v319, %v389
  %v391 = vpop.f32.mrb[0].mxu0
  %v392 = vadd.f32 %v321, %v391
  %393 = vdwg.mxu0
  %394 = vrot.lane.b32.xlu0 %v23, 15
  %v395 = vpop.permute.xlu0 %394
  %396 = vrot.lane.b32.xlu0 %v25, 15
  %v397 = vpop.permute.xlu0 %396
  %398 = vrot.lane.b32.xlu0 %v24, 15
  %v399 = vpop.permute.xlu0 %398
  %400 = vrot.lane.b32.xlu0 %v26, 15
  %v401 = vpop.permute.xlu0 %400
  %vm402 = vcmp.lt.s32.totalorder %v29, 15
  %v403 = vsel %vm402, %v395, %v399
  %v404 = vsel %vm402, %v397, %v401
  %v405 = vsel %vm402, %v399, %v395
  %v406 = vsel %vm402, %v401, %v397
  %vm407 = vcmp.le.s32.totalorder %v27, 14
  %v408 = vsel %vm407, 1, 0
  %v409 = vlaneseq
  %v410 = vshrl.u32 %v409, 7
  %v411 = vsub.s32 0, %v410
  %v412 = vrot.slane %v408, %v411
  %v413 = vlaneseq
  %v414 = vshrl.u32 %v413, 7
  %v415 = vsub.s32 1, %v414
  %v416 = vrot.slane %v408, %v415
  %vm417 = vcmp.ne.s32.totalorder %v412, 0
  %vm418 = vcmp.ne.s32.totalorder %v416, 0
  %vm419 = vmand %vm47, %vm417
  %vm420 = vmand %vm48, %vm418
  %v421 = vsel %vm419, 1, 0
  %v422 = vsel %vm420, 1, 0
  %v423 = vlaneseq
  %v424 = vshrl.u32 %v423, 7
  %v425 = vsub.s32 0, %v424
  %v426 = vrot.slane %v421, %v425
  %v427 = vlaneseq
  %v428 = vshrl.u32 %v427, 7
  %v429 = vsub.s32 0, %v428
  %v430 = vrot.slane %v422, %v429
  %vm431 = vcmp.eq.s32.totalorder %v426, 1
  %vm432 = vcmp.eq.s32.totalorder %v430, 1
  %v433 = vsel %vm431, %v405, 0.0
  %v434 = vsel %vm432, %v403, 0.0
  %v435 = vsel %vm431, %v406, 0.0
  %v436 = vsel %vm432, %v404, 0.0
  %s437 = scalar_lea.vmem %s1, 16
  %v438 = vld [vmem:[%s437] sm:$0xff]
  %v440 = vsel %vm103, %v438, 0
  %442 = vmatprep.subr.mxu0 %v434
  %443 = vmatpush1.msra.mxu0 %v433
  %444 = vmatprep.subr.mxu0 0.0
  %445 = vmatpush1.msra.mxu0 0.0
  %446 = vmatprep.subr.mxu0 0.0
  %447 = vmatpush1.msra.mxu0 0.0
  %448 = vmatprep.subr.mxu0 0.0
  %449 = vmatpush1.msra.mxu0 0.0
  %450 = vmatprep.subr.mxu0 0.0
  %451 = vmatpush1.msra.mxu0 0.0
  %452 = vmatprep.subr.mxu0 0.0
  %453 = vmatpush1.msra.mxu0 0.0
  %454 = vmatprep.subr.mxu0 0.0
  %455 = vmatpush1.msra.mxu0 0.0
  %456 = vmatprep.subr.mxu0 0.0
  %457 = vmatpush1.msra.mxu0 0.0
  %458 = vmatprep.subr.mxu0 0.0
  %459 = vmatpush1.msra.mxu0 0.0
  %460 = vmatprep.subr.mxu0 0.0
  %461 = vmatpush1.msra.mxu0 0.0
  %462 = vmatprep.subr.mxu0 0.0
  %463 = vmatpush1.msra.mxu0 0.0
  %464 = vmatprep.subr.mxu0 0.0
  %465 = vmatpush1.msra.mxu0 0.0
  %466 = vmatprep.subr.mxu0 0.0
  %467 = vmatpush1.msra.mxu0 0.0
  %468 = vmatprep.subr.mxu0 0.0
  %469 = vmatpush1.msra.mxu0 0.0
  %470 = vmatprep.subr.mxu0 0.0
  %471 = vmatpush1.msra.mxu0 0.0
  %472 = vmatprep.subr.mxu0 0.0
  %473 = vmatpush1.msra.mxu0 0.0
  %474 = vmatprep.subr.mxu0 0.0
  %475 = vmatpush1.msra.mxu0 0.0
  %476 = vmatprep.subr.mxu0 0.0
  %477 = vmatpush1.msra.mxu0 0.0
  %478 = vmatprep.subr.mxu0 0.0
  %479 = vmatpush1.msra.mxu0 0.0
  %480 = vmatprep.subr.mxu0 0.0
  %481 = vmatpush1.msra.mxu0 0.0
  %482 = vmatprep.subr.mxu0 0.0
  %483 = vmatpush1.msra.mxu0 0.0
  %484 = vmatprep.subr.mxu0 0.0
  %485 = vmatpush1.msra.mxu0 0.0
  %486 = vmatprep.subr.mxu0 0.0
  %487 = vmatpush1.msra.mxu0 0.0
  %488 = vmatprep.subr.mxu0 0.0
  %489 = vmatpush1.msra.mxu0 0.0
  %490 = vmatprep.subr.mxu0 0.0
  %491 = vmatpush1.msra.mxu0 0.0
  %492 = vmatprep.subr.mxu0 0.0
  %493 = vmatpush1.msra.mxu0 0.0
  %494 = vmatprep.subr.mxu0 0.0
  %495 = vmatpush1.msra.mxu0 0.0
  %496 = vmatprep.subr.mxu0 0.0
  %497 = vmatpush1.msra.mxu0 0.0
  %498 = vmatprep.subr.mxu0 0.0
  %499 = vmatpush1.msra.mxu0 0.0
  %500 = vmatprep.subr.mxu0 0.0
  %501 = vmatpush1.msra.mxu0 0.0
  %502 = vmatprep.subr.mxu0 0.0
  %503 = vmatpush1.msra.mxu0 0.0
  %504 = vmatprep.subr.mxu0 0.0
  %505 = vmatpush1.msra.mxu0 0.0
  %506 = vmatprep.mubr.f32.mxu0 0.0
  %507 = vmatmul.mubr.f32.gmra.mrb[0].mxu0 %v440
  %v508 = vpop.f32.mrb[0].mxu0
  %v509 = vadd.f32 0.0, %v508
  %v510 = vpop.f32.mrb[0].mxu0
  %v511 = vadd.f32 0.0, %v510
  %512 = vdwg.mxu0
  %v513 = vadd.f32 %v248, %v509
  %v514 = vadd.f32 %v250, %v511
  %515 = vmatprep.subr.mxu0 %v436
  %516 = vmatpush1.msra.mxu0 %v435
  %517 = vmatprep.subr.mxu0 0.0
  %518 = vmatpush1.msra.mxu0 0.0
  %519 = vmatprep.subr.mxu0 0.0
  %520 = vmatpush1.msra.mxu0 0.0
  %521 = vmatprep.subr.mxu0 0.0
  %522 = vmatpush1.msra.mxu0 0.0
  %523 = vmatprep.subr.mxu0 0.0
  %524 = vmatpush1.msra.mxu0 0.0
  %525 = vmatprep.subr.mxu0 0.0
  %526 = vmatpush1.msra.mxu0 0.0
  %527 = vmatprep.subr.mxu0 0.0
  %528 = vmatpush1.msra.mxu0 0.0
  %529 = vmatprep.subr.mxu0 0.0
  %530 = vmatpush1.msra.mxu0 0.0
  %531 = vmatprep.subr.mxu0 0.0
  %532 = vmatpush1.msra.mxu0 0.0
  %533 = vmatprep.subr.mxu0 0.0
  %534 = vmatpush1.msra.mxu0 0.0
  %535 = vmatprep.subr.mxu0 0.0
  %536 = vmatpush1.msra.mxu0 0.0
  %537 = vmatprep.subr.mxu0 0.0
  %538 = vmatpush1.msra.mxu0 0.0
  %539 = vmatprep.subr.mxu0 0.0
  %540 = vmatpush1.msra.mxu0 0.0
  %541 = vmatprep.subr.mxu0 0.0
  %542 = vmatpush1.msra.mxu0 0.0
  %543 = vmatprep.subr.mxu0 0.0
  %544 = vmatpush1.msra.mxu0 0.0
  %545 = vmatprep.subr.mxu0 0.0
  %546 = vmatpush1.msra.mxu0 0.0
  %547 = vmatprep.subr.mxu0 0.0
  %548 = vmatpush1.msra.mxu0 0.0
  %549 = vmatprep.subr.mxu0 0.0
  %550 = vmatpush1.msra.mxu0 0.0
  %551 = vmatprep.subr.mxu0 0.0
  %552 = vmatpush1.msra.mxu0 0.0
  %553 = vmatprep.subr.mxu0 0.0
  %554 = vmatpush1.msra.mxu0 0.0
  %555 = vmatprep.subr.mxu0 0.0
  %556 = vmatpush1.msra.mxu0 0.0
  %557 = vmatprep.subr.mxu0 0.0
  %558 = vmatpush1.msra.mxu0 0.0
  %559 = vmatprep.subr.mxu0 0.0
  %560 = vmatpush1.msra.mxu0 0.0
  %561 = vmatprep.subr.mxu0 0.0
  %562 = vmatpush1.msra.mxu0 0.0
  %563 = vmatprep.subr.mxu0 0.0
  %564 = vmatpush1.msra.mxu0 0.0
  %565 = vmatprep.subr.mxu0 0.0
  %566 = vmatpush1.msra.mxu0 0.0
  %567 = vmatprep.subr.mxu0 0.0
  %568 = vmatpush1.msra.mxu0 0.0
  %569 = vmatprep.subr.mxu0 0.0
  %570 = vmatpush1.msra.mxu0 0.0
  %571 = vmatprep.subr.mxu0 0.0
  %572 = vmatpush1.msra.mxu0 0.0
  %573 = vmatprep.subr.mxu0 0.0
  %574 = vmatpush1.msra.mxu0 0.0
  %575 = vmatprep.subr.mxu0 0.0
  %576 = vmatpush1.msra.mxu0 0.0
  %577 = vmatprep.subr.mxu0 0.0
  %578 = vmatpush1.msra.mxu0 0.0
  %579 = vmatprep.mubr.f32.mxu0 0.0
  %580 = vmatmul.mubr.f32.gmra.mrb[0].mxu0 %v440
  %v581 = vpop.f32.mrb[0].mxu0
  %v582 = vadd.f32 0.0, %v581
  %v583 = vpop.f32.mrb[0].mxu0
  %v584 = vadd.f32 0.0, %v583
  %585 = vdwg.mxu0
  %v586 = vadd.f32 %v390, %v582
  %v587 = vadd.f32 %v392, %v584
  %588 = vrot.lane.b32.xlu0 %v23, 1
  %v589 = vpop.permute.xlu0 %588
  %590 = vrot.lane.b32.xlu0 %v25, 1
  %v591 = vpop.permute.xlu0 %590
  %592 = vrot.lane.b32.xlu0 %v24, 1
  %v593 = vpop.permute.xlu0 %592
  %594 = vrot.lane.b32.xlu0 %v26, 1
  %v595 = vpop.permute.xlu0 %594
  %vm596 = vcmp.lt.s32.totalorder %v29, 1
  %v597 = vsel %vm596, %v589, %v593
  %v598 = vsel %vm596, %v591, %v595
  %v599 = vsel %vm596, %v593, %v589
  %v600 = vsel %vm596, %v595, %v591
  %vm601 = vcmp.eq.s32.totalorder %v54, 1
  %vm602 = vcmp.eq.s32.totalorder %v58, 1
  %v603 = vsel %vm601, %v599, 0.0
  %v604 = vsel %vm602, %v597, 0.0
  %v605 = vsel %vm601, %v600, 0.0
  %v606 = vsel %vm602, %v598, 0.0
  %s607 = scalar_lea.vmem %s1, 24
  %v608 = vld [vmem:[%s607] sm:$0xff]
  %v610 = vsel %vm103, %v608, 0
  %612 = vmatprep.subr.mxu0 %v604
  %613 = vmatpush1.msra.mxu0 %v603
  %614 = vmatprep.subr.mxu0 0.0
  %615 = vmatpush1.msra.mxu0 0.0
  %616 = vmatprep.subr.mxu0 0.0
  %617 = vmatpush1.msra.mxu0 0.0
  %618 = vmatprep.subr.mxu0 0.0
  %619 = vmatpush1.msra.mxu0 0.0
  %620 = vmatprep.subr.mxu0 0.0
  %621 = vmatpush1.msra.mxu0 0.0
  %622 = vmatprep.subr.mxu0 0.0
  %623 = vmatpush1.msra.mxu0 0.0
  %624 = vmatprep.subr.mxu0 0.0
  %625 = vmatpush1.msra.mxu0 0.0
  %626 = vmatprep.subr.mxu0 0.0
  %627 = vmatpush1.msra.mxu0 0.0
  %628 = vmatprep.subr.mxu0 0.0
  %629 = vmatpush1.msra.mxu0 0.0
  %630 = vmatprep.subr.mxu0 0.0
  %631 = vmatpush1.msra.mxu0 0.0
  %632 = vmatprep.subr.mxu0 0.0
  %633 = vmatpush1.msra.mxu0 0.0
  %634 = vmatprep.subr.mxu0 0.0
  %635 = vmatpush1.msra.mxu0 0.0
  %636 = vmatprep.subr.mxu0 0.0
  %637 = vmatpush1.msra.mxu0 0.0
  %638 = vmatprep.subr.mxu0 0.0
  %639 = vmatpush1.msra.mxu0 0.0
  %640 = vmatprep.subr.mxu0 0.0
  %641 = vmatpush1.msra.mxu0 0.0
  %642 = vmatprep.subr.mxu0 0.0
  %643 = vmatpush1.msra.mxu0 0.0
  %644 = vmatprep.subr.mxu0 0.0
  %645 = vmatpush1.msra.mxu0 0.0
  %646 = vmatprep.subr.mxu0 0.0
  %647 = vmatpush1.msra.mxu0 0.0
  %648 = vmatprep.subr.mxu0 0.0
  %649 = vmatpush1.msra.mxu0 0.0
  %650 = vmatprep.subr.mxu0 0.0
  %651 = vmatpush1.msra.mxu0 0.0
  %652 = vmatprep.subr.mxu0 0.0
  %653 = vmatpush1.msra.mxu0 0.0
  %654 = vmatprep.subr.mxu0 0.0
  %655 = vmatpush1.msra.mxu0 0.0
  %656 = vmatprep.subr.mxu0 0.0
  %657 = vmatpush1.msra.mxu0 0.0
  %658 = vmatprep.subr.mxu0 0.0
  %659 = vmatpush1.msra.mxu0 0.0
  %660 = vmatprep.subr.mxu0 0.0
  %661 = vmatpush1.msra.mxu0 0.0
  %662 = vmatprep.subr.mxu0 0.0
  %663 = vmatpush1.msra.mxu0 0.0
  %664 = vmatprep.subr.mxu0 0.0
  %665 = vmatpush1.msra.mxu0 0.0
  %666 = vmatprep.subr.mxu0 0.0
  %667 = vmatpush1.msra.mxu0 0.0
  %668 = vmatprep.subr.mxu0 0.0
  %669 = vmatpush1.msra.mxu0 0.0
  %670 = vmatprep.subr.mxu0 0.0
  %671 = vmatpush1.msra.mxu0 0.0
  %672 = vmatprep.subr.mxu0 0.0
  %673 = vmatpush1.msra.mxu0 0.0
  %674 = vmatprep.subr.mxu0 0.0
  %675 = vmatpush1.msra.mxu0 0.0
  %676 = vmatprep.mubr.f32.mxu0 0.0
  %677 = vmatmul.mubr.f32.gmra.mrb[0].mxu0 %v610
  %v678 = vpop.f32.mrb[0].mxu0
  %v679 = vadd.f32 0.0, %v678
  %v680 = vpop.f32.mrb[0].mxu0
  %v681 = vadd.f32 0.0, %v680
  %682 = vdwg.mxu0
  %v683 = vadd.f32 %v513, %v679
  %v684 = vadd.f32 %v514, %v681
  %685 = vmatprep.subr.mxu0 %v606
  %686 = vmatpush1.msra.mxu0 %v605
  %687 = vmatprep.subr.mxu0 0.0
  %688 = vmatpush1.msra.mxu0 0.0
  %689 = vmatprep.subr.mxu0 0.0
  %690 = vmatpush1.msra.mxu0 0.0
  %691 = vmatprep.subr.mxu0 0.0
  %692 = vmatpush1.msra.mxu0 0.0
  %693 = vmatprep.subr.mxu0 0.0
  %694 = vmatpush1.msra.mxu0 0.0
  %695 = vmatprep.subr.mxu0 0.0
  %696 = vmatpush1.msra.mxu0 0.0
  %697 = vmatprep.subr.mxu0 0.0
  %698 = vmatpush1.msra.mxu0 0.0
  %699 = vmatprep.subr.mxu0 0.0
  %700 = vmatpush1.msra.mxu0 0.0
  %701 = vmatprep.subr.mxu0 0.0
  %702 = vmatpush1.msra.mxu0 0.0
  %703 = vmatprep.subr.mxu0 0.0
  %704 = vmatpush1.msra.mxu0 0.0
  %705 = vmatprep.subr.mxu0 0.0
  %706 = vmatpush1.msra.mxu0 0.0
  %707 = vmatprep.subr.mxu0 0.0
  %708 = vmatpush1.msra.mxu0 0.0
  %709 = vmatprep.subr.mxu0 0.0
  %710 = vmatpush1.msra.mxu0 0.0
  %711 = vmatprep.subr.mxu0 0.0
  %712 = vmatpush1.msra.mxu0 0.0
  %713 = vmatprep.subr.mxu0 0.0
  %714 = vmatpush1.msra.mxu0 0.0
  %715 = vmatprep.subr.mxu0 0.0
  %716 = vmatpush1.msra.mxu0 0.0
  %717 = vmatprep.subr.mxu0 0.0
  %718 = vmatpush1.msra.mxu0 0.0
  %719 = vmatprep.subr.mxu0 0.0
  %720 = vmatpush1.msra.mxu0 0.0
  %721 = vmatprep.subr.mxu0 0.0
  %722 = vmatpush1.msra.mxu0 0.0
  %723 = vmatprep.subr.mxu0 0.0
  %724 = vmatpush1.msra.mxu0 0.0
  %725 = vmatprep.subr.mxu0 0.0
  %726 = vmatpush1.msra.mxu0 0.0
  %727 = vmatprep.subr.mxu0 0.0
  %728 = vmatpush1.msra.mxu0 0.0
  %729 = vmatprep.subr.mxu0 0.0
  %730 = vmatpush1.msra.mxu0 0.0
  %731 = vmatprep.subr.mxu0 0.0
  %732 = vmatpush1.msra.mxu0 0.0
  %733 = vmatprep.subr.mxu0 0.0
  %734 = vmatpush1.msra.mxu0 0.0
  %735 = vmatprep.subr.mxu0 0.0
  %736 = vmatpush1.msra.mxu0 0.0
  %737 = vmatprep.subr.mxu0 0.0
  %738 = vmatpush1.msra.mxu0 0.0
  %739 = vmatprep.subr.mxu0 0.0
  %740 = vmatpush1.msra.mxu0 0.0
  %741 = vmatprep.subr.mxu0 0.0
  %742 = vmatpush1.msra.mxu0 0.0
  %743 = vmatprep.subr.mxu0 0.0
  %744 = vmatpush1.msra.mxu0 0.0
  %745 = vmatprep.subr.mxu0 0.0
  %746 = vmatpush1.msra.mxu0 0.0
  %747 = vmatprep.subr.mxu0 0.0
  %748 = vmatpush1.msra.mxu0 0.0
  %749 = vmatprep.mubr.f32.mxu0 0.0
  %750 = vmatmul.mubr.f32.gmra.mrb[0].mxu0 %v610
  %v751 = vpop.f32.mrb[0].mxu0
  %v752 = vadd.f32 0.0, %v751
  %v753 = vpop.f32.mrb[0].mxu0
  %v754 = vadd.f32 0.0, %v753
  %755 = vdwg.mxu0
  %v756 = vadd.f32 %v586, %v752
  %v757 = vadd.f32 %v587, %v754
  %s758 = scalar_lea.vmem %s1, 32
  %v759 = vld [vmem:[%s758] sm:$0xff]
  %v761 = vsel %vm103, %v759, 0
  %763 = vmatprep.subr.mxu0 %v24
  %764 = vmatpush1.msra.mxu0 %v23
  %765 = vmatprep.subr.mxu0 0.0
  %766 = vmatpush1.msra.mxu0 0.0
  %767 = vmatprep.subr.mxu0 0.0
  %768 = vmatpush1.msra.mxu0 0.0
  %769 = vmatprep.subr.mxu0 0.0
  %770 = vmatpush1.msra.mxu0 0.0
  %771 = vmatprep.subr.mxu0 0.0
  %772 = vmatpush1.msra.mxu0 0.0
  %773 = vmatprep.subr.mxu0 0.0
  %774 = vmatpush1.msra.mxu0 0.0
  %775 = vmatprep.subr.mxu0 0.0
  %776 = vmatpush1.msra.mxu0 0.0
  %777 = vmatprep.subr.mxu0 0.0
  %778 = vmatpush1.msra.mxu0 0.0
  %779 = vmatprep.subr.mxu0 0.0
  %780 = vmatpush1.msra.mxu0 0.0
  %781 = vmatprep.subr.mxu0 0.0
  %782 = vmatpush1.msra.mxu0 0.0
  %783 = vmatprep.subr.mxu0 0.0
  %784 = vmatpush1.msra.mxu0 0.0
  %785 = vmatprep.subr.mxu0 0.0
  %786 = vmatpush1.msra.mxu0 0.0
  %787 = vmatprep.subr.mxu0 0.0
  %788 = vmatpush1.msra.mxu0 0.0
  %789 = vmatprep.subr.mxu0 0.0
  %790 = vmatpush1.msra.mxu0 0.0
  %791 = vmatprep.subr.mxu0 0.0
  %792 = vmatpush1.msra.mxu0 0.0
  %793 = vmatprep.subr.mxu0 0.0
  %794 = vmatpush1.msra.mxu0 0.0
  %795 = vmatprep.subr.mxu0 0.0
  %796 = vmatpush1.msra.mxu0 0.0
  %797 = vmatprep.subr.mxu0 0.0
  %798 = vmatpush1.msra.mxu0 0.0
  %799 = vmatprep.subr.mxu0 0.0
  %800 = vmatpush1.msra.mxu0 0.0
  %801 = vmatprep.subr.mxu0 0.0
  %802 = vmatpush1.msra.mxu0 0.0
  %803 = vmatprep.subr.mxu0 0.0
  %804 = vmatpush1.msra.mxu0 0.0
  %805 = vmatprep.subr.mxu0 0.0
  %806 = vmatpush1.msra.mxu0 0.0
  %807 = vmatprep.subr.mxu0 0.0
  %808 = vmatpush1.msra.mxu0 0.0
  %809 = vmatprep.subr.mxu0 0.0
  %810 = vmatpush1.msra.mxu0 0.0
  %811 = vmatprep.subr.mxu0 0.0
  %812 = vmatpush1.msra.mxu0 0.0
  %813 = vmatprep.subr.mxu0 0.0
  %814 = vmatpush1.msra.mxu0 0.0
  %815 = vmatprep.subr.mxu0 0.0
  %816 = vmatpush1.msra.mxu0 0.0
  %817 = vmatprep.subr.mxu0 0.0
  %818 = vmatpush1.msra.mxu0 0.0
  %819 = vmatprep.subr.mxu0 0.0
  %820 = vmatpush1.msra.mxu0 0.0
  %821 = vmatprep.subr.mxu0 0.0
  %822 = vmatpush1.msra.mxu0 0.0
  %823 = vmatprep.subr.mxu0 0.0
  %824 = vmatpush1.msra.mxu0 0.0
  %825 = vmatprep.subr.mxu0 0.0
  %826 = vmatpush1.msra.mxu0 0.0
  %827 = vmatprep.mubr.f32.mxu0 0.0
  %828 = vmatmul.mubr.f32.gmra.mrb[0].mxu0 %v761
  %v829 = vpop.f32.mrb[0].mxu0
  %v830 = vadd.f32 0.0, %v829
  %v831 = vpop.f32.mrb[0].mxu0
  %v832 = vadd.f32 0.0, %v831
  %833 = vdwg.mxu0
  %v834 = vadd.f32 %v683, %v830
  %v835 = vadd.f32 %v684, %v832
  %836 = vmatprep.subr.mxu0 %v26
  %837 = vmatpush1.msra.mxu0 %v25
  %838 = vmatprep.subr.mxu0 0.0
  %839 = vmatpush1.msra.mxu0 0.0
  %840 = vmatprep.subr.mxu0 0.0
  %841 = vmatpush1.msra.mxu0 0.0
  %842 = vmatprep.subr.mxu0 0.0
  %843 = vmatpush1.msra.mxu0 0.0
  %844 = vmatprep.subr.mxu0 0.0
  %845 = vmatpush1.msra.mxu0 0.0
  %846 = vmatprep.subr.mxu0 0.0
  %847 = vmatpush1.msra.mxu0 0.0
  %848 = vmatprep.subr.mxu0 0.0
  %849 = vmatpush1.msra.mxu0 0.0
  %850 = vmatprep.subr.mxu0 0.0
  %851 = vmatpush1.msra.mxu0 0.0
  %852 = vmatprep.subr.mxu0 0.0
  %853 = vmatpush1.msra.mxu0 0.0
  %854 = vmatprep.subr.mxu0 0.0
  %855 = vmatpush1.msra.mxu0 0.0
  %856 = vmatprep.subr.mxu0 0.0
  %857 = vmatpush1.msra.mxu0 0.0
  %858 = vmatprep.subr.mxu0 0.0
  %859 = vmatpush1.msra.mxu0 0.0
  %860 = vmatprep.subr.mxu0 0.0
  %861 = vmatpush1.msra.mxu0 0.0
  %862 = vmatprep.subr.mxu0 0.0
  %863 = vmatpush1.msra.mxu0 0.0
  %864 = vmatprep.subr.mxu0 0.0
  %865 = vmatpush1.msra.mxu0 0.0
  %866 = vmatprep.subr.mxu0 0.0
  %867 = vmatpush1.msra.mxu0 0.0
  %868 = vmatprep.subr.mxu0 0.0
  %869 = vmatpush1.msra.mxu0 0.0
  %870 = vmatprep.subr.mxu0 0.0
  %871 = vmatpush1.msra.mxu0 0.0
  %872 = vmatprep.subr.mxu0 0.0
  %873 = vmatpush1.msra.mxu0 0.0
  %874 = vmatprep.subr.mxu0 0.0
  %875 = vmatpush1.msra.mxu0 0.0
  %876 = vmatprep.subr.mxu0 0.0
  %877 = vmatpush1.msra.mxu0 0.0
  %878 = vmatprep.subr.mxu0 0.0
  %879 = vmatpush1.msra.mxu0 0.0
  %880 = vmatprep.subr.mxu0 0.0
  %881 = vmatpush1.msra.mxu0 0.0
  %882 = vmatprep.subr.mxu0 0.0
  %883 = vmatpush1.msra.mxu0 0.0
  %884 = vmatprep.subr.mxu0 0.0
  %885 = vmatpush1.msra.mxu0 0.0
  %886 = vmatprep.subr.mxu0 0.0
  %887 = vmatpush1.msra.mxu0 0.0
  %888 = vmatprep.subr.mxu0 0.0
  %889 = vmatpush1.msra.mxu0 0.0
  %890 = vmatprep.subr.mxu0 0.0
  %891 = vmatpush1.msra.mxu0 0.0
  %892 = vmatprep.subr.mxu0 0.0
  %893 = vmatpush1.msra.mxu0 0.0
  %894 = vmatprep.subr.mxu0 0.0
  %895 = vmatpush1.msra.mxu0 0.0
  %896 = vmatprep.subr.mxu0 0.0
  %897 = vmatpush1.msra.mxu0 0.0
  %898 = vmatprep.subr.mxu0 0.0
  %899 = vmatpush1.msra.mxu0 0.0
  %900 = vmatprep.mubr.f32.mxu0 0.0
  %901 = vmatmul.mubr.f32.gmra.mrb[0].mxu0 %v761
  %v902 = vpop.f32.mrb[0].mxu0
  %v903 = vadd.f32 0.0, %v902
  %v904 = vpop.f32.mrb[0].mxu0
  %v905 = vadd.f32 0.0, %v904
  %906 = vdwg.mxu0
  %v907 = vadd.f32 %v756, %v903
  %v908 = vadd.f32 %v757, %v905
  %909 = vrot.lane.b32.xlu0 %v23, 127
  %v910 = vpop.permute.xlu0 %909
  %911 = vrot.lane.b32.xlu0 %v25, 127
  %v912 = vpop.permute.xlu0 %911
  %913 = vrot.lane.b32.xlu0 %v24, 127
  %v914 = vpop.permute.xlu0 %913
  %915 = vrot.lane.b32.xlu0 %v26, 127
  %v916 = vpop.permute.xlu0 %915
  %vm917 = vcmp.lt.s32.totalorder %v29, 127
  %v918 = vsel %vm917, %v910, %v914
  %v919 = vsel %vm917, %v912, %v916
  %v920 = vsel %vm917, %v914, %v910
  %v921 = vsel %vm917, %v916, %v912
  %vm922 = vcmp.eq.s32.totalorder %v412, 1
  %vm923 = vcmp.eq.s32.totalorder %v416, 1
  %v924 = vsel %vm922, %v918, 0.0
  %v925 = vsel %vm923, %v920, 0.0
  %v926 = vsel %vm922, %v919, 0.0
  %v927 = vsel %vm923, %v921, 0.0
  %s928 = scalar_lea.vmem %s1, 40
  %v929 = vld [vmem:[%s928] sm:$0xff]
  %v931 = vsel %vm103, %v929, 0
  %933 = vmatprep.subr.mxu0 %v925
  %934 = vmatpush1.msra.mxu0 %v924
  %935 = vmatprep.subr.mxu0 0.0
  %936 = vmatpush1.msra.mxu0 0.0
  %937 = vmatprep.subr.mxu0 0.0
  %938 = vmatpush1.msra.mxu0 0.0
  %939 = vmatprep.subr.mxu0 0.0
  %940 = vmatpush1.msra.mxu0 0.0
  %941 = vmatprep.subr.mxu0 0.0
  %942 = vmatpush1.msra.mxu0 0.0
  %943 = vmatprep.subr.mxu0 0.0
  %944 = vmatpush1.msra.mxu0 0.0
  %945 = vmatprep.subr.mxu0 0.0
  %946 = vmatpush1.msra.mxu0 0.0
  %947 = vmatprep.subr.mxu0 0.0
  %948 = vmatpush1.msra.mxu0 0.0
  %949 = vmatprep.subr.mxu0 0.0
  %950 = vmatpush1.msra.mxu0 0.0
  %951 = vmatprep.subr.mxu0 0.0
  %952 = vmatpush1.msra.mxu0 0.0
  %953 = vmatprep.subr.mxu0 0.0
  %954 = vmatpush1.msra.mxu0 0.0
  %955 = vmatprep.subr.mxu0 0.0
  %956 = vmatpush1.msra.mxu0 0.0
  %957 = vmatprep.subr.mxu0 0.0
  %958 = vmatpush1.msra.mxu0 0.0
  %959 = vmatprep.subr.mxu0 0.0
  %960 = vmatpush1.msra.mxu0 0.0
  %961 = vmatprep.subr.mxu0 0.0
  %962 = vmatpush1.msra.mxu0 0.0
  %963 = vmatprep.subr.mxu0 0.0
  %964 = vmatpush1.msra.mxu0 0.0
  %965 = vmatprep.subr.mxu0 0.0
  %966 = vmatpush1.msra.mxu0 0.0
  %967 = vmatprep.subr.mxu0 0.0
  %968 = vmatpush1.msra.mxu0 0.0
  %969 = vmatprep.subr.mxu0 0.0
  %970 = vmatpush1.msra.mxu0 0.0
  %971 = vmatprep.subr.mxu0 0.0
  %972 = vmatpush1.msra.mxu0 0.0
  %973 = vmatprep.subr.mxu0 0.0
  %974 = vmatpush1.msra.mxu0 0.0
  %975 = vmatprep.subr.mxu0 0.0
  %976 = vmatpush1.msra.mxu0 0.0
  %977 = vmatprep.subr.mxu0 0.0
  %978 = vmatpush1.msra.mxu0 0.0
  %979 = vmatprep.subr.mxu0 0.0
  %980 = vmatpush1.msra.mxu0 0.0
  %981 = vmatprep.subr.mxu0 0.0
  %982 = vmatpush1.msra.mxu0 0.0
  %983 = vmatprep.subr.mxu0 0.0
  %984 = vmatpush1.msra.mxu0 0.0
  %985 = vmatprep.subr.mxu0 0.0
  %986 = vmatpush1.msra.mxu0 0.0
  %987 = vmatprep.subr.mxu0 0.0
  %988 = vmatpush1.msra.mxu0 0.0
  %989 = vmatprep.subr.mxu0 0.0
  %990 = vmatpush1.msra.mxu0 0.0
  %991 = vmatprep.subr.mxu0 0.0
  %992 = vmatpush1.msra.mxu0 0.0
  %993 = vmatprep.subr.mxu0 0.0
  %994 = vmatpush1.msra.mxu0 0.0
  %995 = vmatprep.subr.mxu0 0.0
  %996 = vmatpush1.msra.mxu0 0.0
  %997 = vmatprep.mubr.f32.mxu0 0.0
  %998 = vmatmul.mubr.f32.gmra.mrb[0].mxu0 %v931
  %v999 = vpop.f32.mrb[0].mxu0
  %v1000 = vadd.f32 0.0, %v999
  %v1001 = vpop.f32.mrb[0].mxu0
  %v1002 = vadd.f32 0.0, %v1001
  %1003 = vdwg.mxu0
  %v1004 = vadd.f32 %v834, %v1000
  %v1005 = vadd.f32 %v835, %v1002
  %1006 = vmatprep.subr.mxu0 %v927
  %1007 = vmatpush1.msra.mxu0 %v926
  %1008 = vmatprep.subr.mxu0 0.0
  %1009 = vmatpush1.msra.mxu0 0.0
  %1010 = vmatprep.subr.mxu0 0.0
  %1011 = vmatpush1.msra.mxu0 0.0
  %1012 = vmatprep.subr.mxu0 0.0
  %1013 = vmatpush1.msra.mxu0 0.0
  %1014 = vmatprep.subr.mxu0 0.0
  %1015 = vmatpush1.msra.mxu0 0.0
  %1016 = vmatprep.subr.mxu0 0.0
  %1017 = vmatpush1.msra.mxu0 0.0
  %1018 = vmatprep.subr.mxu0 0.0
  %1019 = vmatpush1.msra.mxu0 0.0
  %1020 = vmatprep.subr.mxu0 0.0
  %1021 = vmatpush1.msra.mxu0 0.0
  %1022 = vmatprep.subr.mxu0 0.0
  %1023 = vmatpush1.msra.mxu0 0.0
  %1024 = vmatprep.subr.mxu0 0.0
  %1025 = vmatpush1.msra.mxu0 0.0
  %1026 = vmatprep.subr.mxu0 0.0
  %1027 = vmatpush1.msra.mxu0 0.0
  %1028 = vmatprep.subr.mxu0 0.0
  %1029 = vmatpush1.msra.mxu0 0.0
  %1030 = vmatprep.subr.mxu0 0.0
  %1031 = vmatpush1.msra.mxu0 0.0
  %1032 = vmatprep.subr.mxu0 0.0
  %1033 = vmatpush1.msra.mxu0 0.0
  %1034 = vmatprep.subr.mxu0 0.0
  %1035 = vmatpush1.msra.mxu0 0.0
  %1036 = vmatprep.subr.mxu0 0.0
  %1037 = vmatpush1.msra.mxu0 0.0
  %1038 = vmatprep.subr.mxu0 0.0
  %1039 = vmatpush1.msra.mxu0 0.0
  %1040 = vmatprep.subr.mxu0 0.0
  %1041 = vmatpush1.msra.mxu0 0.0
  %1042 = vmatprep.subr.mxu0 0.0
  %1043 = vmatpush1.msra.mxu0 0.0
  %1044 = vmatprep.subr.mxu0 0.0
  %1045 = vmatpush1.msra.mxu0 0.0
  %1046 = vmatprep.subr.mxu0 0.0
  %1047 = vmatpush1.msra.mxu0 0.0
  %1048 = vmatprep.subr.mxu0 0.0
  %1049 = vmatpush1.msra.mxu0 0.0
  %1050 = vmatprep.subr.mxu0 0.0
  %1051 = vmatpush1.msra.mxu0 0.0
  %1052 = vmatprep.subr.mxu0 0.0
  %1053 = vmatpush1.msra.mxu0 0.0
  %1054 = vmatprep.subr.mxu0 0.0
  %1055 = vmatpush1.msra.mxu0 0.0
  %1056 = vmatprep.subr.mxu0 0.0
  %1057 = vmatpush1.msra.mxu0 0.0
  %1058 = vmatprep.subr.mxu0 0.0
  %1059 = vmatpush1.msra.mxu0 0.0
  %1060 = vmatprep.subr.mxu0 0.0
  %1061 = vmatpush1.msra.mxu0 0.0
  %1062 = vmatprep.subr.mxu0 0.0
  %1063 = vmatpush1.msra.mxu0 0.0
  %1064 = vmatprep.subr.mxu0 0.0
  %1065 = vmatpush1.msra.mxu0 0.0
  %1066 = vmatprep.subr.mxu0 0.0
  %1067 = vmatpush1.msra.mxu0 0.0
  %1068 = vmatprep.subr.mxu0 0.0
  %1069 = vmatpush1.msra.mxu0 0.0
  %1070 = vmatprep.mubr.f32.mxu0 0.0
  %1071 = vmatmul.mubr.f32.gmra.mrb[0].mxu0 %v931
  %v1072 = vpop.f32.mrb[0].mxu0
  %v1073 = vadd.f32 0.0, %v1072
  %v1074 = vpop.f32.mrb[0].mxu0
  %v1075 = vadd.f32 0.0, %v1074
  %1076 = vdwg.mxu0
  %v1077 = vadd.f32 %v907, %v1073
  %v1078 = vadd.f32 %v908, %v1075
  %1079 = vrot.lane.b32.xlu0 %v23, 113
  %v1080 = vpop.permute.xlu0 %1079
  %1081 = vrot.lane.b32.xlu0 %v25, 113
  %v1082 = vpop.permute.xlu0 %1081
  %1083 = vrot.lane.b32.xlu0 %v24, 113
  %v1084 = vpop.permute.xlu0 %1083
  %1085 = vrot.lane.b32.xlu0 %v26, 113
  %v1086 = vpop.permute.xlu0 %1085
  %vm1087 = vcmp.lt.s32.totalorder %v29, 113
  %v1088 = vsel %vm1087, %v1080, %v1084
  %v1089 = vsel %vm1087, %v1082, %v1086
  %v1090 = vsel %vm1087, %v1084, %v1080
  %v1091 = vsel %vm1087, %v1086, %v1082
  %vm1092 = vcmp.lt.s32.totalorder %v29, 240
  %vm1093 = vcmp.lt.s32.totalorder %v30, 240
  %vm1094 = vmand %vm1092, %vm59
  %vm1095 = vmand %vm1093, %vm60
  %v1096 = vsel %vm1094, 1, 0
  %v1097 = vsel %vm1095, 1, 0
  %v1098 = vlaneseq
  %v1099 = vshrl.u32 %v1098, 7
  %v1100 = vsub.s32 0, %v1099
  %v1101 = vrot.slane %v1096, %v1100
  %v1102 = vlaneseq
  %v1103 = vshrl.u32 %v1102, 7
  %v1104 = vsub.s32 0, %v1103
  %v1105 = vrot.slane %v1097, %v1104
  %vm1106 = vcmp.eq.s32.totalorder %v1101, 1
  %vm1107 = vcmp.eq.s32.totalorder %v1105, 1
  %v1108 = vsel %vm1106, %v1088, 0.0
  %v1109 = vsel %vm1107, %v1090, 0.0
  %v1110 = vsel %vm1106, %v1089, 0.0
  %v1111 = vsel %vm1107, %v1091, 0.0
  %s1112 = scalar_lea.vmem %s1, 48
  %v1113 = vld [vmem:[%s1112] sm:$0xff]
  %v1115 = vsel %vm103, %v1113, 0
  %1117 = vmatprep.subr.mxu0 %v1109
  %1118 = vmatpush1.msra.mxu0 %v1108
  %1119 = vmatprep.subr.mxu0 0.0
  %1120 = vmatpush1.msra.mxu0 0.0
  %1121 = vmatprep.subr.mxu0 0.0
  %1122 = vmatpush1.msra.mxu0 0.0
  %1123 = vmatprep.subr.mxu0 0.0
  %1124 = vmatpush1.msra.mxu0 0.0
  %1125 = vmatprep.subr.mxu0 0.0
  %1126 = vmatpush1.msra.mxu0 0.0
  %1127 = vmatprep.subr.mxu0 0.0
  %1128 = vmatpush1.msra.mxu0 0.0
  %1129 = vmatprep.subr.mxu0 0.0
  %1130 = vmatpush1.msra.mxu0 0.0
  %1131 = vmatprep.subr.mxu0 0.0
  %1132 = vmatpush1.msra.mxu0 0.0
  %1133 = vmatprep.subr.mxu0 0.0
  %1134 = vmatpush1.msra.mxu0 0.0
  %1135 = vmatprep.subr.mxu0 0.0
  %1136 = vmatpush1.msra.mxu0 0.0
  %1137 = vmatprep.subr.mxu0 0.0
  %1138 = vmatpush1.msra.mxu0 0.0
  %1139 = vmatprep.subr.mxu0 0.0
  %1140 = vmatpush1.msra.mxu0 0.0
  %1141 = vmatprep.subr.mxu0 0.0
  %1142 = vmatpush1.msra.mxu0 0.0
  %1143 = vmatprep.subr.mxu0 0.0
  %1144 = vmatpush1.msra.mxu0 0.0
  %1145 = vmatprep.subr.mxu0 0.0
  %1146 = vmatpush1.msra.mxu0 0.0
  %1147 = vmatprep.subr.mxu0 0.0
  %1148 = vmatpush1.msra.mxu0 0.0
  %1149 = vmatprep.subr.mxu0 0.0
  %1150 = vmatpush1.msra.mxu0 0.0
  %1151 = vmatprep.subr.mxu0 0.0
  %1152 = vmatpush1.msra.mxu0 0.0
  %1153 = vmatprep.subr.mxu0 0.0
  %1154 = vmatpush1.msra.mxu0 0.0
  %1155 = vmatprep.subr.mxu0 0.0
  %1156 = vmatpush1.msra.mxu0 0.0
  %1157 = vmatprep.subr.mxu0 0.0
  %1158 = vmatpush1.msra.mxu0 0.0
  %1159 = vmatprep.subr.mxu0 0.0
  %1160 = vmatpush1.msra.mxu0 0.0
  %1161 = vmatprep.subr.mxu0 0.0
  %1162 = vmatpush1.msra.mxu0 0.0
  %1163 = vmatprep.subr.mxu0 0.0
  %1164 = vmatpush1.msra.mxu0 0.0
  %1165 = vmatprep.subr.mxu0 0.0
  %1166 = vmatpush1.msra.mxu0 0.0
  %1167 = vmatprep.subr.mxu0 0.0
  %1168 = vmatpush1.msra.mxu0 0.0
  %1169 = vmatprep.subr.mxu0 0.0
  %1170 = vmatpush1.msra.mxu0 0.0
  %1171 = vmatprep.subr.mxu0 0.0
  %1172 = vmatpush1.msra.mxu0 0.0
  %1173 = vmatprep.subr.mxu0 0.0
  %1174 = vmatpush1.msra.mxu0 0.0
  %1175 = vmatprep.subr.mxu0 0.0
  %1176 = vmatpush1.msra.mxu0 0.0
  %1177 = vmatprep.subr.mxu0 0.0
  %1178 = vmatpush1.msra.mxu0 0.0
  %1179 = vmatprep.subr.mxu0 0.0
  %1180 = vmatpush1.msra.mxu0 0.0
  %1181 = vmatprep.mubr.f32.mxu0 0.0
  %1182 = vmatmul.mubr.f32.gmra.mrb[0].mxu0 %v1115
  %v1183 = vpop.f32.mrb[0].mxu0
  %v1184 = vadd.f32 0.0, %v1183
  %v1185 = vpop.f32.mrb[0].mxu0
  %v1186 = vadd.f32 0.0, %v1185
  %1187 = vdwg.mxu0
  %v1188 = vadd.f32 %v1004, %v1184
  %v1189 = vadd.f32 %v1005, %v1186
  %1190 = vmatprep.subr.mxu0 %v1111
  %1191 = vmatpush1.msra.mxu0 %v1110
  %1192 = vmatprep.subr.mxu0 0.0
  %1193 = vmatpush1.msra.mxu0 0.0
  %1194 = vmatprep.subr.mxu0 0.0
  %1195 = vmatpush1.msra.mxu0 0.0
  %1196 = vmatprep.subr.mxu0 0.0
  %1197 = vmatpush1.msra.mxu0 0.0
  %1198 = vmatprep.subr.mxu0 0.0
  %1199 = vmatpush1.msra.mxu0 0.0
  %1200 = vmatprep.subr.mxu0 0.0
  %1201 = vmatpush1.msra.mxu0 0.0
  %1202 = vmatprep.subr.mxu0 0.0
  %1203 = vmatpush1.msra.mxu0 0.0
  %1204 = vmatprep.subr.mxu0 0.0
  %1205 = vmatpush1.msra.mxu0 0.0
  %1206 = vmatprep.subr.mxu0 0.0
  %1207 = vmatpush1.msra.mxu0 0.0
  %1208 = vmatprep.subr.mxu0 0.0
  %1209 = vmatpush1.msra.mxu0 0.0
  %1210 = vmatprep.subr.mxu0 0.0
  %1211 = vmatpush1.msra.mxu0 0.0
  %1212 = vmatprep.subr.mxu0 0.0
  %1213 = vmatpush1.msra.mxu0 0.0
  %1214 = vmatprep.subr.mxu0 0.0
  %1215 = vmatpush1.msra.mxu0 0.0
  %1216 = vmatprep.subr.mxu0 0.0
  %1217 = vmatpush1.msra.mxu0 0.0
  %1218 = vmatprep.subr.mxu0 0.0
  %1219 = vmatpush1.msra.mxu0 0.0
  %1220 = vmatprep.subr.mxu0 0.0
  %1221 = vmatpush1.msra.mxu0 0.0
  %1222 = vmatprep.subr.mxu0 0.0
  %1223 = vmatpush1.msra.mxu0 0.0
  %1224 = vmatprep.subr.mxu0 0.0
  %1225 = vmatpush1.msra.mxu0 0.0
  %1226 = vmatprep.subr.mxu0 0.0
  %1227 = vmatpush1.msra.mxu0 0.0
  %1228 = vmatprep.subr.mxu0 0.0
  %1229 = vmatpush1.msra.mxu0 0.0
  %1230 = vmatprep.subr.mxu0 0.0
  %1231 = vmatpush1.msra.mxu0 0.0
  %1232 = vmatprep.subr.mxu0 0.0
  %1233 = vmatpush1.msra.mxu0 0.0
  %1234 = vmatprep.subr.mxu0 0.0
  %1235 = vmatpush1.msra.mxu0 0.0
  %1236 = vmatprep.subr.mxu0 0.0
  %1237 = vmatpush1.msra.mxu0 0.0
  %1238 = vmatprep.subr.mxu0 0.0
  %1239 = vmatpush1.msra.mxu0 0.0
  %1240 = vmatprep.subr.mxu0 0.0
  %1241 = vmatpush1.msra.mxu0 0.0
  %1242 = vmatprep.subr.mxu0 0.0
  %1243 = vmatpush1.msra.mxu0 0.0
  %1244 = vmatprep.subr.mxu0 0.0
  %1245 = vmatpush1.msra.mxu0 0.0
  %1246 = vmatprep.subr.mxu0 0.0
  %1247 = vmatpush1.msra.mxu0 0.0
  %1248 = vmatprep.subr.mxu0 0.0
  %1249 = vmatpush1.msra.mxu0 0.0
  %1250 = vmatprep.subr.mxu0 0.0
  %1251 = vmatpush1.msra.mxu0 0.0
  %1252 = vmatprep.subr.mxu0 0.0
  %1253 = vmatpush1.msra.mxu0 0.0
  %1254 = vmatprep.mubr.f32.mxu0 0.0
  %1255 = vmatmul.mubr.f32.gmra.mrb[0].mxu0 %v1115
  %v1256 = vpop.f32.mrb[0].mxu0
  %v1257 = vadd.f32 0.0, %v1256
  %v1258 = vpop.f32.mrb[0].mxu0
  %v1259 = vadd.f32 0.0, %v1258
  %1260 = vdwg.mxu0
  %v1261 = vadd.f32 %v1077, %v1257
  %v1262 = vadd.f32 %v1078, %v1259
  %1263 = vrot.lane.b32.xlu0 %v23, 112
  %v1264 = vpop.permute.xlu0 %1263
  %1265 = vrot.lane.b32.xlu0 %v25, 112
  %v1266 = vpop.permute.xlu0 %1265
  %1267 = vrot.lane.b32.xlu0 %v24, 112
  %v1268 = vpop.permute.xlu0 %1267
  %1269 = vrot.lane.b32.xlu0 %v26, 112
  %v1270 = vpop.permute.xlu0 %1269
  %vm1271 = vcmp.lt.s32.totalorder %v29, 112
  %v1272 = vsel %vm1271, %v1264, %v1268
  %v1273 = vsel %vm1271, %v1266, %v1270
  %v1274 = vsel %vm1271, %v1268, %v1264
  %v1275 = vsel %vm1271, %v1270, %v1266
  %v1276 = vsel %vm1092, 1, 0
  %v1277 = vsel %vm1093, 1, 0
  %vm1278 = vcmp.eq.s32.totalorder %v1276, 1
  %vm1279 = vcmp.eq.s32.totalorder %v1277, 1
  %v1280 = vsel %vm1278, %v1272, 0.0
  %v1281 = vsel %vm1279, %v1274, 0.0
  %v1282 = vsel %vm1278, %v1273, 0.0
  %v1283 = vsel %vm1279, %v1275, 0.0
  %s1284 = scalar_lea.vmem %s1, 56
  %v1285 = vld [vmem:[%s1284] sm:$0xff]
  %v1287 = vsel %vm103, %v1285, 0
  %1289 = vmatprep.subr.mxu0 %v1281
  %1290 = vmatpush1.msra.mxu0 %v1280
  %1291 = vmatprep.subr.mxu0 0.0
  %1292 = vmatpush1.msra.mxu0 0.0
  %1293 = vmatprep.subr.mxu0 0.0
  %1294 = vmatpush1.msra.mxu0 0.0
  %1295 = vmatprep.subr.mxu0 0.0
  %1296 = vmatpush1.msra.mxu0 0.0
  %1297 = vmatprep.subr.mxu0 0.0
  %1298 = vmatpush1.msra.mxu0 0.0
  %1299 = vmatprep.subr.mxu0 0.0
  %1300 = vmatpush1.msra.mxu0 0.0
  %1301 = vmatprep.subr.mxu0 0.0
  %1302 = vmatpush1.msra.mxu0 0.0
  %1303 = vmatprep.subr.mxu0 0.0
  %1304 = vmatpush1.msra.mxu0 0.0
  %1305 = vmatprep.subr.mxu0 0.0
  %1306 = vmatpush1.msra.mxu0 0.0
  %1307 = vmatprep.subr.mxu0 0.0
  %1308 = vmatpush1.msra.mxu0 0.0
  %1309 = vmatprep.subr.mxu0 0.0
  %1310 = vmatpush1.msra.mxu0 0.0
  %1311 = vmatprep.subr.mxu0 0.0
  %1312 = vmatpush1.msra.mxu0 0.0
  %1313 = vmatprep.subr.mxu0 0.0
  %1314 = vmatpush1.msra.mxu0 0.0
  %1315 = vmatprep.subr.mxu0 0.0
  %1316 = vmatpush1.msra.mxu0 0.0
  %1317 = vmatprep.subr.mxu0 0.0
  %1318 = vmatpush1.msra.mxu0 0.0
  %1319 = vmatprep.subr.mxu0 0.0
  %1320 = vmatpush1.msra.mxu0 0.0
  %1321 = vmatprep.subr.mxu0 0.0
  %1322 = vmatpush1.msra.mxu0 0.0
  %1323 = vmatprep.subr.mxu0 0.0
  %1324 = vmatpush1.msra.mxu0 0.0
  %1325 = vmatprep.subr.mxu0 0.0
  %1326 = vmatpush1.msra.mxu0 0.0
  %1327 = vmatprep.subr.mxu0 0.0
  %1328 = vmatpush1.msra.mxu0 0.0
  %1329 = vmatprep.subr.mxu0 0.0
  %1330 = vmatpush1.msra.mxu0 0.0
  %1331 = vmatprep.subr.mxu0 0.0
  %1332 = vmatpush1.msra.mxu0 0.0
  %1333 = vmatprep.subr.mxu0 0.0
  %1334 = vmatpush1.msra.mxu0 0.0
  %1335 = vmatprep.subr.mxu0 0.0
  %1336 = vmatpush1.msra.mxu0 0.0
  %1337 = vmatprep.subr.mxu0 0.0
  %1338 = vmatpush1.msra.mxu0 0.0
  %1339 = vmatprep.subr.mxu0 0.0
  %1340 = vmatpush1.msra.mxu0 0.0
  %1341 = vmatprep.subr.mxu0 0.0
  %1342 = vmatpush1.msra.mxu0 0.0
  %1343 = vmatprep.subr.mxu0 0.0
  %1344 = vmatpush1.msra.mxu0 0.0
  %1345 = vmatprep.subr.mxu0 0.0
  %1346 = vmatpush1.msra.mxu0 0.0
  %1347 = vmatprep.subr.mxu0 0.0
  %1348 = vmatpush1.msra.mxu0 0.0
  %1349 = vmatprep.subr.mxu0 0.0
  %1350 = vmatpush1.msra.mxu0 0.0
  %1351 = vmatprep.subr.mxu0 0.0
  %1352 = vmatpush1.msra.mxu0 0.0
  %1353 = vmatprep.mubr.f32.mxu0 0.0
  %1354 = vmatmul.mubr.f32.gmra.mrb[0].mxu0 %v1287
  %v1355 = vpop.f32.mrb[0].mxu0
  %v1356 = vadd.f32 0.0, %v1355
  %v1357 = vpop.f32.mrb[0].mxu0
  %v1358 = vadd.f32 0.0, %v1357
  %1359 = vdwg.mxu0
  %v1360 = vadd.f32 %v1188, %v1356
  %v1361 = vadd.f32 %v1189, %v1358
  %1362 = vmatprep.subr.mxu0 %v1283
  %1363 = vmatpush1.msra.mxu0 %v1282
  %1364 = vmatprep.subr.mxu0 0.0
  %1365 = vmatpush1.msra.mxu0 0.0
  %1366 = vmatprep.subr.mxu0 0.0
  %1367 = vmatpush1.msra.mxu0 0.0
  %1368 = vmatprep.subr.mxu0 0.0
  %1369 = vmatpush1.msra.mxu0 0.0
  %1370 = vmatprep.subr.mxu0 0.0
  %1371 = vmatpush1.msra.mxu0 0.0
  %1372 = vmatprep.subr.mxu0 0.0
  %1373 = vmatpush1.msra.mxu0 0.0
  %1374 = vmatprep.subr.mxu0 0.0
  %1375 = vmatpush1.msra.mxu0 0.0
  %1376 = vmatprep.subr.mxu0 0.0
  %1377 = vmatpush1.msra.mxu0 0.0
  %1378 = vmatprep.subr.mxu0 0.0
  %1379 = vmatpush1.msra.mxu0 0.0
  %1380 = vmatprep.subr.mxu0 0.0
  %1381 = vmatpush1.msra.mxu0 0.0
  %1382 = vmatprep.subr.mxu0 0.0
  %1383 = vmatpush1.msra.mxu0 0.0
  %1384 = vmatprep.subr.mxu0 0.0
  %1385 = vmatpush1.msra.mxu0 0.0
  %1386 = vmatprep.subr.mxu0 0.0
  %1387 = vmatpush1.msra.mxu0 0.0
  %1388 = vmatprep.subr.mxu0 0.0
  %1389 = vmatpush1.msra.mxu0 0.0
  %1390 = vmatprep.subr.mxu0 0.0
  %1391 = vmatpush1.msra.mxu0 0.0
  %1392 = vmatprep.subr.mxu0 0.0
  %1393 = vmatpush1.msra.mxu0 0.0
  %1394 = vmatprep.subr.mxu0 0.0
  %1395 = vmatpush1.msra.mxu0 0.0
  %1396 = vmatprep.subr.mxu0 0.0
  %1397 = vmatpush1.msra.mxu0 0.0
  %1398 = vmatprep.subr.mxu0 0.0
  %1399 = vmatpush1.msra.mxu0 0.0
  %1400 = vmatprep.subr.mxu0 0.0
  %1401 = vmatpush1.msra.mxu0 0.0
  %1402 = vmatprep.subr.mxu0 0.0
  %1403 = vmatpush1.msra.mxu0 0.0
  %1404 = vmatprep.subr.mxu0 0.0
  %1405 = vmatpush1.msra.mxu0 0.0
  %1406 = vmatprep.subr.mxu0 0.0
  %1407 = vmatpush1.msra.mxu0 0.0
  %1408 = vmatprep.subr.mxu0 0.0
  %1409 = vmatpush1.msra.mxu0 0.0
  %1410 = vmatprep.subr.mxu0 0.0
  %1411 = vmatpush1.msra.mxu0 0.0
  %1412 = vmatprep.subr.mxu0 0.0
  %1413 = vmatpush1.msra.mxu0 0.0
  %1414 = vmatprep.subr.mxu0 0.0
  %1415 = vmatpush1.msra.mxu0 0.0
  %1416 = vmatprep.subr.mxu0 0.0
  %1417 = vmatpush1.msra.mxu0 0.0
  %1418 = vmatprep.subr.mxu0 0.0
  %1419 = vmatpush1.msra.mxu0 0.0
  %1420 = vmatprep.subr.mxu0 0.0
  %1421 = vmatpush1.msra.mxu0 0.0
  %1422 = vmatprep.subr.mxu0 0.0
  %1423 = vmatpush1.msra.mxu0 0.0
  %1424 = vmatprep.subr.mxu0 0.0
  %1425 = vmatpush1.msra.mxu0 0.0
  %1426 = vmatprep.mubr.f32.mxu0 0.0
  %1427 = vmatmul.mubr.f32.gmra.mrb[0].mxu0 %v1287
  %v1428 = vpop.f32.mrb[0].mxu0
  %v1429 = vadd.f32 0.0, %v1428
  %v1430 = vpop.f32.mrb[0].mxu0
  %v1431 = vadd.f32 0.0, %v1430
  %1432 = vdwg.mxu0
  %v1433 = vadd.f32 %v1261, %v1429
  %v1434 = vadd.f32 %v1262, %v1431
  %1435 = vrot.lane.b32.xlu0 %v23, 111
  %v1436 = vpop.permute.xlu0 %1435
  %1437 = vrot.lane.b32.xlu0 %v25, 111
  %v1438 = vpop.permute.xlu0 %1437
  %1439 = vrot.lane.b32.xlu0 %v24, 111
  %v1440 = vpop.permute.xlu0 %1439
  %1441 = vrot.lane.b32.xlu0 %v26, 111
  %v1442 = vpop.permute.xlu0 %1441
  %vm1443 = vcmp.lt.s32.totalorder %v29, 111
  %v1444 = vsel %vm1443, %v1436, %v1440
  %v1445 = vsel %vm1443, %v1438, %v1442
  %v1446 = vsel %vm1443, %v1440, %v1436
  %v1447 = vsel %vm1443, %v1442, %v1438
  %vm1448 = vmand %vm1092, %vm417
  %vm1449 = vmand %vm1093, %vm418
  %v1450 = vsel %vm1448, 1, 0
  %v1451 = vsel %vm1449, 1, 0
  %v1452 = vlaneseq
  %v1453 = vshrl.u32 %v1452, 7
  %v1454 = vsub.s32 0, %v1453
  %v1455 = vrot.slane %v1450, %v1454
  %v1456 = vlaneseq
  %v1457 = vshrl.u32 %v1456, 7
  %v1458 = vsub.s32 0, %v1457
  %v1459 = vrot.slane %v1451, %v1458
  %vm1460 = vcmp.eq.s32.totalorder %v1455, 1
  %vm1461 = vcmp.eq.s32.totalorder %v1459, 1
  %v1462 = vsel %vm1460, %v1444, 0.0
  %v1463 = vsel %vm1461, %v1446, 0.0
  %v1464 = vsel %vm1460, %v1445, 0.0
  %v1465 = vsel %vm1461, %v1447, 0.0
  %s1466 = scalar_lea.vmem %s1, 64
  %v1467 = vld [vmem:[%s1466] sm:$0xff]
  %v1469 = vsel %vm103, %v1467, 0
  %1471 = vmatprep.subr.mxu0 %v1463
  %1472 = vmatpush1.msra.mxu0 %v1462
  %1473 = vmatprep.subr.mxu0 0.0
  %1474 = vmatpush1.msra.mxu0 0.0
  %1475 = vmatprep.subr.mxu0 0.0
  %1476 = vmatpush1.msra.mxu0 0.0
  %1477 = vmatprep.subr.mxu0 0.0
  %1478 = vmatpush1.msra.mxu0 0.0
  %1479 = vmatprep.subr.mxu0 0.0
  %1480 = vmatpush1.msra.mxu0 0.0
  %1481 = vmatprep.subr.mxu0 0.0
  %1482 = vmatpush1.msra.mxu0 0.0
  %1483 = vmatprep.subr.mxu0 0.0
  %1484 = vmatpush1.msra.mxu0 0.0
  %1485 = vmatprep.subr.mxu0 0.0
  %1486 = vmatpush1.msra.mxu0 0.0
  %1487 = vmatprep.subr.mxu0 0.0
  %1488 = vmatpush1.msra.mxu0 0.0
  %1489 = vmatprep.subr.mxu0 0.0
  %1490 = vmatpush1.msra.mxu0 0.0
  %1491 = vmatprep.subr.mxu0 0.0
  %1492 = vmatpush1.msra.mxu0 0.0
  %1493 = vmatprep.subr.mxu0 0.0
  %1494 = vmatpush1.msra.mxu0 0.0
  %1495 = vmatprep.subr.mxu0 0.0
  %1496 = vmatpush1.msra.mxu0 0.0
  %1497 = vmatprep.subr.mxu0 0.0
  %1498 = vmatpush1.msra.mxu0 0.0
  %1499 = vmatprep.subr.mxu0 0.0
  %1500 = vmatpush1.msra.mxu0 0.0
  %1501 = vmatprep.subr.mxu0 0.0
  %1502 = vmatpush1.msra.mxu0 0.0
  %1503 = vmatprep.subr.mxu0 0.0
  %1504 = vmatpush1.msra.mxu0 0.0
  %1505 = vmatprep.subr.mxu0 0.0
  %1506 = vmatpush1.msra.mxu0 0.0
  %1507 = vmatprep.subr.mxu0 0.0
  %1508 = vmatpush1.msra.mxu0 0.0
  %1509 = vmatprep.subr.mxu0 0.0
  %1510 = vmatpush1.msra.mxu0 0.0
  %1511 = vmatprep.subr.mxu0 0.0
  %1512 = vmatpush1.msra.mxu0 0.0
  %1513 = vmatprep.subr.mxu0 0.0
  %1514 = vmatpush1.msra.mxu0 0.0
  %1515 = vmatprep.subr.mxu0 0.0
  %1516 = vmatpush1.msra.mxu0 0.0
  %1517 = vmatprep.subr.mxu0 0.0
  %1518 = vmatpush1.msra.mxu0 0.0
  %1519 = vmatprep.subr.mxu0 0.0
  %1520 = vmatpush1.msra.mxu0 0.0
  %1521 = vmatprep.subr.mxu0 0.0
  %1522 = vmatpush1.msra.mxu0 0.0
  %1523 = vmatprep.subr.mxu0 0.0
  %1524 = vmatpush1.msra.mxu0 0.0
  %1525 = vmatprep.subr.mxu0 0.0
  %1526 = vmatpush1.msra.mxu0 0.0
  %1527 = vmatprep.subr.mxu0 0.0
  %1528 = vmatpush1.msra.mxu0 0.0
  %1529 = vmatprep.subr.mxu0 0.0
  %1530 = vmatpush1.msra.mxu0 0.0
  %1531 = vmatprep.subr.mxu0 0.0
  %1532 = vmatpush1.msra.mxu0 0.0
  %1533 = vmatprep.subr.mxu0 0.0
  %1534 = vmatpush1.msra.mxu0 0.0
  %1535 = vmatprep.mubr.f32.mxu0 0.0
  %1536 = vmatmul.mubr.f32.gmra.mrb[0].mxu0 %v1469
  %v1537 = vpop.f32.mrb[0].mxu0
  %v1538 = vadd.f32 0.0, %v1537
  %v1539 = vpop.f32.mrb[0].mxu0
  %v1540 = vadd.f32 0.0, %v1539
  %1541 = vdwg.mxu0
  %v1542 = vadd.f32 %v1360, %v1538
  %v1543 = vadd.f32 %v1361, %v1540
  %1544 = vmatprep.subr.mxu0 %v1465
  %1545 = vmatpush1.msra.mxu0 %v1464
  %1546 = vmatprep.subr.mxu0 0.0
  %1547 = vmatpush1.msra.mxu0 0.0
  %1548 = vmatprep.subr.mxu0 0.0
  %1549 = vmatpush1.msra.mxu0 0.0
  %1550 = vmatprep.subr.mxu0 0.0
  %1551 = vmatpush1.msra.mxu0 0.0
  %1552 = vmatprep.subr.mxu0 0.0
  %1553 = vmatpush1.msra.mxu0 0.0
  %1554 = vmatprep.subr.mxu0 0.0
  %1555 = vmatpush1.msra.mxu0 0.0
  %1556 = vmatprep.subr.mxu0 0.0
  %1557 = vmatpush1.msra.mxu0 0.0
  %1558 = vmatprep.subr.mxu0 0.0
  %1559 = vmatpush1.msra.mxu0 0.0
  %1560 = vmatprep.subr.mxu0 0.0
  %1561 = vmatpush1.msra.mxu0 0.0
  %1562 = vmatprep.subr.mxu0 0.0
  %1563 = vmatpush1.msra.mxu0 0.0
  %1564 = vmatprep.subr.mxu0 0.0
  %1565 = vmatpush1.msra.mxu0 0.0
  %1566 = vmatprep.subr.mxu0 0.0
  %1567 = vmatpush1.msra.mxu0 0.0
  %1568 = vmatprep.subr.mxu0 0.0
  %1569 = vmatpush1.msra.mxu0 0.0
  %1570 = vmatprep.subr.mxu0 0.0
  %1571 = vmatpush1.msra.mxu0 0.0
  %1572 = vmatprep.subr.mxu0 0.0
  %1573 = vmatpush1.msra.mxu0 0.0
  %1574 = vmatprep.subr.mxu0 0.0
  %1575 = vmatpush1.msra.mxu0 0.0
  %1576 = vmatprep.subr.mxu0 0.0
  %1577 = vmatpush1.msra.mxu0 0.0
  %1578 = vmatprep.subr.mxu0 0.0
  %1579 = vmatpush1.msra.mxu0 0.0
  %1580 = vmatprep.subr.mxu0 0.0
  %1581 = vmatpush1.msra.mxu0 0.0
  %1582 = vmatprep.subr.mxu0 0.0
  %1583 = vmatpush1.msra.mxu0 0.0
  %1584 = vmatprep.subr.mxu0 0.0
  %1585 = vmatpush1.msra.mxu0 0.0
  %1586 = vmatprep.subr.mxu0 0.0
  %1587 = vmatpush1.msra.mxu0 0.0
  %1588 = vmatprep.subr.mxu0 0.0
  %1589 = vmatpush1.msra.mxu0 0.0
  %1590 = vmatprep.subr.mxu0 0.0
  %1591 = vmatpush1.msra.mxu0 0.0
  %1592 = vmatprep.subr.mxu0 0.0
  %1593 = vmatpush1.msra.mxu0 0.0
  %1594 = vmatprep.subr.mxu0 0.0
  %1595 = vmatpush1.msra.mxu0 0.0
  %1596 = vmatprep.subr.mxu0 0.0
  %1597 = vmatpush1.msra.mxu0 0.0
  %1598 = vmatprep.subr.mxu0 0.0
  %1599 = vmatpush1.msra.mxu0 0.0
  %1600 = vmatprep.subr.mxu0 0.0
  %1601 = vmatpush1.msra.mxu0 0.0
  %1602 = vmatprep.subr.mxu0 0.0
  %1603 = vmatpush1.msra.mxu0 0.0
  %1604 = vmatprep.subr.mxu0 0.0
  %1605 = vmatpush1.msra.mxu0 0.0
  %1606 = vmatprep.subr.mxu0 0.0
  %1607 = vmatpush1.msra.mxu0 0.0
  %1608 = vmatprep.mubr.f32.mxu0 0.0
  %1609 = vmatmul.mubr.f32.gmra.mrb[0].mxu0 %v1469
  %v1610 = vpop.f32.mrb[0].mxu0
  %v1611 = vadd.f32 0.0, %v1610
  %v1612 = vpop.f32.mrb[0].mxu0
  %v1613 = vadd.f32 0.0, %v1612
  %1614 = vdwg.mxu0
  %v1615 = vadd.f32 %v1433, %v1611
  %v1616 = vadd.f32 %v1434, %v1613
  %1618 = vset.pattern.permute.xlu0 0
  %1619 = vperm.xlu0 %1618, %v31
  %v1620 = vpop.permute.xlu0 %1619
  %v1622 = vadd.f32 %v1542, %v1620
  %v1623 = vadd.f32 %v1543, %v1620
  %v1624 = vadd.f32 %v1615, %v1620
  %v1625 = vadd.f32 %v1616, %v1620
  %v1626 = vadd.f32 %v1622, %v1623
  %1627 = vadd.xlane.f32.xlu0 %v1626
  %v1628 = vpop.xlane.xlu0 %1627
  %v1629 = vadd.f32 %v1628, 0.0
  %v1630 = vadd.f32 %v1624, %v1625
  %1631 = vadd.xlane.f32.xlu0 %v1630
  %v1632 = vpop.xlane.xlu0 %1631
  %v1633 = vadd.f32 %v1629, %v1632
  %v1634 = vrcp.pop 512.0
  %v1635 = vmul.f32 %v1633, %v1634
  %v1636 = vsub.f32 %v1622, %v1635
  %v1637 = vsub.f32 %v1623, %v1635
  %v1638 = vmul.f32 %v1636, %v1636
  %v1639 = vmul.f32 %v1637, %v1637
  %v1640 = vadd.f32 %v1638, %v1639
  %1641 = vadd.xlane.f32.xlu0 %v1640
  %v1642 = vpop.xlane.xlu0 %1641
  %v1643 = vadd.f32 %v1642, 0.0
  %v1644 = vsub.f32 %v1624, %v1635
  %v1645 = vsub.f32 %v1625, %v1635
  %v1646 = vmul.f32 %v1644, %v1644
  %v1647 = vmul.f32 %v1645, %v1645
  %v1648 = vadd.f32 %v1646, %v1647
  %1649 = vadd.xlane.f32.xlu0 %v1648
  %v1650 = vpop.xlane.xlu0 %1649
  %v1651 = vadd.f32 %v1643, %v1650
  %v1652 = vmul.f32 %v1651, %v1634
  %v1653 = vadd.f32 %v1652, 1e-05
  %v1654 = vrsqrt.pop %v1653
  %v1655 = vmul.f32 %v32, %v1654
  %v1656 = vmul.f32 %v1635, %v1655
  %v1657 = vsub.f32 %v33, %v1656
  %1659 = vset.pattern.permute.xlu0 0
  %1660 = vperm.xlu0 %1659, %v1655
  %v1661 = vpop.permute.xlu0 %1660
  %v1663 = vmul.f32 %v1622, %v1661
  %v1664 = vmul.f32 %v1623, %v1661
  %1666 = vset.pattern.permute.xlu0 0
  %1667 = vperm.xlu0 %1666, %v1657
  %v1668 = vpop.permute.xlu0 %1667
  %v1670 = vadd.f32 %v1663, %v1668
  %v1671 = vadd.f32 %v1664, %v1668
  %v1672 = vmax.f32 %v1670, 0.0
  %v1673 = vmax.f32 %v1671, 0.0
  %v1674 = vadd.f32 %v1672, %v23
  %v1675 = vadd.f32 %v1673, %v24
  %1676 = vst [vmem:[%s6] sm:$0xff] %v1674
  %1677 = vst [vmem:[%s6 + $0x8] sm:$0xff] %v1675
  %v1678 = vmul.f32 %v1624, %v1661
  %v1679 = vmul.f32 %v1625, %v1661
  %v1680 = vadd.f32 %v1678, %v1668
  %v1681 = vadd.f32 %v1679, %v1668
  %v1682 = vmax.f32 %v1680, 0.0
  %v1683 = vmax.f32 %v1681, 0.0
  %v1684 = vadd.f32 %v1682, %v25
  %v1685 = vadd.f32 %v1683, %v26
  %1686 = vst [vmem:[%s6 + $0x10] sm:$0xff] %v1684
  %1687 = vst [vmem:[%s6 + $0x18] sm:$0xff] %v1685
  // Predicated region
  $region26: #{residual_forward.1} parent=0 // pred_check
    _
  $region27: #{residual_forward.1} parent=0 // pred_check_branch
    %1689 = sbr.rel (0) target = $region29
  $region28: #{residual_forward.1} parent=0 // pred_region
    _
  $region29: #{residual_forward.1} parent=0 // pred_fallthru
    _
  // Predicated region
  $region30: #{residual_forward.1} parent=0 // pred_check
    _
  $region31: #{residual_forward.1} parent=0 // pred_check_branch
    %1691 = sbr.rel (0) target = $region33
  $region32: #{residual_forward.1} parent=0 // pred_region
    _
  $region33: #{residual_forward.1} parent=0 // pred_fallthru
    _

</llo_original>
